<compile_context>
chip_gen: v7x
topology: tpu7x:2x2x1
jax: 0.10.0
libtpu: 0.0.40
codegen_flags: <defaults>
</compile_context>

<pallas_src>
import functools

import jax
import jax.numpy as jnp
from jax.experimental import pallas as pl
from jax.experimental.pallas import tpu as pltpu


def _res_conv_block_kernel(x_ref, dwt_ref, wbig_ref, bias_ref, o_ref, xpad_ref, *, C, K, B):
    """B batch elements per grid step, flat channels-last layout.

    x_ref    : (B, H, W*C)            un-padded input (single stream; also the residual)
    dwt_ref  : (K*K, W*C)             depthwise weights pre-tiled across W
    wbig_ref : (W*C, W*Cout)          block-diagonal (kron) pointwise weights
    bias_ref : (1, W*Cout)            combined bias (dw_b @ pw_w + pw_b), tiled across W
    o_ref    : (B, H, W*Cout)         output (lane-dense minor dim)
    xpad_ref : (B*(H+2p), (W+2p)*C)   VMEM scratch: zero-padded, ReLU'd input, one band/image
    """
    _, H, WC = x_ref.shape
    p = K // 2
    Hp = H + 2 * p

    x = x_ref[...].astype(jnp.float32)                        # (B, H, W*C), pre-activation

    # Zero-padded + activated input lives only in VMEM (no HBM pad round-trip).
    # Re-zero each step (tiny, and safe if the parallel axis is split across cores).
    xpad_ref[...] = jnp.zeros(xpad_ref.shape, jnp.float32)

    dwt = dwt_ref[...]                                        # load depthwise weights once

    accs = []
    for b in range(B):                                        # static, fully unrolled
        xb = x[b]                                             # (H, W*C)
        base = b * Hp                                         # per-image band in the scratch
        xpad_ref[pl.ds(base + p, H), pl.ds(p * C, WC)] = jnp.maximum(xb, 0.0)
        xp = xpad_ref[pl.ds(base, Hp), :]                     # (H+2p, (W+2p)*C)

        # Depthwise KxK conv: K independent chains of K lane-dense VPU FMAs, then tree-sum.
        parts = []
        for ki in range(K):
            rows = xp[ki:ki + H, :]                           # (H, (W+2p)*C) static shift
            part = rows[:, 0:WC] * dwt[ki * K]
            for kj in range(1, K):
                part = part + rows[:, kj * C:kj * C + WC] * dwt[ki * K + kj]
            parts.append(part)
        while len(parts) > 1:
            nxt = [parts[i] + parts[i + 1] for i in range(0, len(parts) - 1, 2)]
            if len(parts) % 2:
                nxt.append(parts[-1])
            parts = nxt

        # Residual with the pre-activation input (depthwise bias already folded into bias_ref).
        accs.append(parts[0] + xb)

    # Pointwise 1x1 conv for all B images in one lane-dense matmul:
    # (B*H, W*C) @ (W*C, W*Cout); stays lane-dense on both sides, no layout shuffle.
    acc = accs[0] if B == 1 else jnp.concatenate(accs, axis=0)
    out = jnp.dot(acc, wbig_ref[...], preferred_element_type=jnp.float32)
    out = (out + bias_ref[0]).astype(o_ref.dtype)

    for b in range(B):
        o_ref[b] = out[b * H:(b + 1) * H, :]


def res_conv_block_nhwc(x_nhwc, dw_w, dw_b, pw_w, pw_b, *, kernel_size=5, max_batch_tile=8):
    """x_nhwc: (N, H, W, C); dw_w: (K, K, C); dw_b: (C,); pw_w: (C, Cout); pw_b: (Cout,)."""
    N, H, W, C = x_nhwc.shape
    K = kernel_size
    p = K // 2
    Cout = pw_w.shape[1]
    WC, WCo = W * C, W * Cout

    # Batch tile: largest divisor of N (<= max_batch_tile) whose working set (double-buffered
    # in/out blocks + padded scratch + weights) stays well inside the scoped-VMEM budget.
    def _vmem_bytes(bt):
        blocks = 2 * bt * H * (WC + WCo) * 4
        scratch = bt * (H + 2 * p) * (W + 2 * p) * C * 4
        weights = (K * K * WC + WC * WCo + WCo) * 4
        return blocks + scratch + weights

    B_TILE = 1
    for d in range(1, min(N, max_batch_tile) + 1):
        if N % d == 0 and _vmem_bytes(d) < 24 * 1024 * 1024:
            B_TILE = d

    # Free row-major reshape to the flat channels-last layout (no transpose, no pad).
    x_flat = x_nhwc.reshape(N, H, WC)

    # Depthwise weights tiled across W so the per-tap broadcast is hoisted out of the kernel.
    dwt = jnp.tile(dw_w, (1, 1, W)).reshape(K * K, WC).astype(jnp.float32)

    # Block-diagonal pointwise weight: (W*C, W*Cout) with W copies of pw_w on the diagonal.
    wbig = jnp.kron(jnp.eye(W, dtype=jnp.float32), pw_w.astype(jnp.float32))

    # Fold the depthwise bias through the pointwise conv:  (dw + dwb + x) @ pw + pwb
    #   == (dw + x) @ pw + (dwb @ pw + pwb)
    comb_b = (dw_b.astype(jnp.float32) @ pw_w.astype(jnp.float32)
              + pw_b.astype(jnp.float32)).reshape(1, Cout)
    bias_t = jnp.tile(comb_b, (1, W))                         # (1, W*Cout)

    kernel = functools.partial(_res_conv_block_kernel, C=C, K=K, B=B_TILE)

    flops = 2 * N * H * W * C * (K * K + Cout)
    bytes_accessed = 4 * (N * H * WC + N * H * WCo + K * K * WC + WC * WCo + WCo)

    y_flat = pl.pallas_call(
        kernel,
        out_shape=jax.ShapeDtypeStruct((N, H, WCo), x_nhwc.dtype),
        grid_spec=pltpu.PrefetchScalarGridSpec(
            num_scalar_prefetch=0,
            grid=(N // B_TILE,),
            in_specs=[
                pl.BlockSpec((B_TILE, H, WC), lambda n: (n, 0, 0)),   # input (also residual)
                pl.BlockSpec((K * K, WC), lambda n: (0, 0)),          # tiled depthwise weights
                pl.BlockSpec((WC, WCo), lambda n: (0, 0)),            # block-diag pointwise W
                pl.BlockSpec((1, WCo), lambda n: (0, 0)),             # combined bias
            ],
            out_specs=pl.BlockSpec((B_TILE, H, WCo), lambda n: (n, 0, 0)),
            scratch_shapes=[
                pltpu.VMEM((B_TILE * (H + 2 * p), (W + 2 * p) * C), jnp.float32)],
        ),
        compiler_params=pltpu.CompilerParams(
            dimension_semantics=("parallel",),
            vmem_limit_bytes=32 * 1024 * 1024,
        ),
        cost_estimate=pl.CostEstimate(
            flops=flops, transcendentals=0, bytes_accessed=bytes_accessed),
    )(x_flat, dwt, wbig, bias_t)

    return y_flat.reshape(N, H, W, Cout)


def res_conv_block_nchw(x_nchw, dw_w, dw_b, pw_w, pw_b, *, kernel_size=5):
    """PyTorch-style NCHW entry point."""
    x_nhwc = jnp.transpose(x_nchw, (0, 2, 3, 1))
    y_nhwc = res_conv_block_nhwc(x_nhwc, dw_w, dw_b, pw_w, pw_b, kernel_size=kernel_size)
    return jnp.transpose(y_nhwc, (0, 3, 1, 2))


def _reference_nhwc(x, dw_w, dw_b, pw_w, pw_b):
    """Pure-JAX reference (lax conv) for a correctness check."""
    C = x.shape[-1]
    K = dw_w.shape[0]
    xr = jnp.maximum(x, 0.0)
    rhs = dw_w.reshape(K, K, 1, C)  # HWIO with feature_group_count = C
    dw = jax.lax.conv_general_dilated(
        xr, rhs, window_strides=(1, 1), padding="SAME",
        dimension_numbers=("NHWC", "HWIO", "NHWC"), feature_group_count=C)
    dw = dw + dw_b
    res = dw + x
    out = jnp.einsum("nhwc,co->nhwo", res, pw_w) + pw_b
    return out


if __name__ == "__main__":
    # small shapes consistent with the module (Conv = nn.Conv2d)
    N, C_in, C_out, H, W, K = 2, 4, 8, 16, 16, 5

    key = jax.random.PRNGKey(0)
    k1, k2, k3, k4, k5 = jax.random.split(key, 5)

    # input in PyTorch NCHW convention
    x_nchw = jax.random.normal(k1, (N, C_in, H, W), dtype=jnp.float32)

    # deterministic synthetic parameters
    # depthwise Conv2d(C_in, C_in, K, padding=K//2, groups=C_in, bias=True)
    # PyTorch weight shape (C_in, 1, K, K) -> stored here as (K, K, C_in)
    dw_w = jax.random.normal(k2, (K, K, C_in), dtype=jnp.float32) * 0.1
    dw_b = jax.random.normal(k3, (C_in,), dtype=jnp.float32) * 0.1
    # pointwise Conv2d(C_in, C_out, 1, bias=True) -> stored as (C_in, C_out)
    pw_w = jax.random.normal(k4, (C_in, C_out), dtype=jnp.float32) * 0.1
    pw_b = jax.random.normal(k5, (C_out,), dtype=jnp.float32) * 0.1

    y = res_conv_block_nchw(x_nchw, dw_w, dw_b, pw_w, pw_b, kernel_size=K)
    y = jax.block_until_ready(y)

    # correctness check against a pure-JAX reference
    x_nhwc = jnp.transpose(x_nchw, (0, 2, 3, 1))
    y_ref = jnp.transpose(_reference_nhwc(x_nhwc, dw_w, dw_b, pw_w, pw_b), (0, 3, 1, 2))
    assert y.shape == (N, C_out, H, W)
    assert jnp.allclose(y, y_ref, atol=1e-4, rtol=1e-4)

    print("KERNEL_OK")
</pallas_src>

<mosaic_0001>
module attributes {stable_mosaic.version = 11 : i64} {
  func.func @_res_conv_block_kernel(%arg0: i32, %arg1: memref<2x16x64xf32, #tpu.memory_space<vmem>>, %arg2: memref<25x64xf32, #tpu.memory_space<vmem>>, %arg3: memref<64x128xf32, #tpu.memory_space<vmem>>, %arg4: memref<1x128xf32, #tpu.memory_space<vmem>>, %arg5: memref<2x16x128xf32, #tpu.memory_space<vmem>>, %arg6: memref<40x80xf32, #tpu.memory_space<vmem>>) attributes {dimension_semantics = [#tpu.dimension_semantics<parallel>], iteration_bounds = array<i64: 1>, scalar_prefetch = 0 : i64, scratch_operands = 1 : i64, tpu.core_type = #tpu.core_type<tc>, window_params = [{transform_indices = @transform_0, window_bounds = array<i64: 2, 16, 64>}, {pipeline_mode = #tpu.pipeline_mode<synchronous>, transform_indices = @transform_1, window_bounds = array<i64: 25, 64>}, {pipeline_mode = #tpu.pipeline_mode<synchronous>, transform_indices = @transform_2, window_bounds = array<i64: 64, 128>}, {pipeline_mode = #tpu.pipeline_mode<synchronous>, transform_indices = @transform_3, window_bounds = array<i64: 1, 128>}, {transform_indices = @transform_4, window_bounds = array<i64: 2, 16, 128>}]} {
    %c0 = arith.constant 0 : index
    %c0_0 = arith.constant 0 : index
    %c0_1 = arith.constant 0 : index
    %0 = vector.load %arg1[%c0, %c0_0, %c0_1] : memref<2x16x64xf32, #tpu.memory_space<vmem>>, vector<2x16x64xf32>
    %cst = arith.constant 0.000000e+00 : f32
    %1 = vector.broadcast %cst : f32 to vector<40x80xf32>
    %c0_2 = arith.constant 0 : index
    %c0_3 = arith.constant 0 : index
    %2 = vector.load %arg6[%c0_2, %c0_3] : memref<40x80xf32, #tpu.memory_space<vmem>>, vector<40x80xf32>
    tpu.vector_store %arg6[%c0_2, %c0_3], %1 {strides = array<i32>} : memref<40x80xf32, #tpu.memory_space<vmem>>, vector<40x80xf32>,
    %c0_4 = arith.constant 0 : index
    %c0_5 = arith.constant 0 : index
    %3 = vector.load %arg2[%c0_4, %c0_5] : memref<25x64xf32, #tpu.memory_space<vmem>>, vector<25x64xf32>
    %4 = vector.extract_strided_slice %0 {offsets = [0, 0, 0], sizes = [1, 16, 64], strides = [1, 1, 1]} : vector<2x16x64xf32> to vector<1x16x64xf32>
    %5 = vector.shape_cast %4 : vector<1x16x64xf32> to vector<16x64xf32>
    %cst_6 = arith.constant 0.000000e+00 : f32
    %6 = vector.broadcast %cst_6 : f32 to vector<16x64xf32>
    %7 = arith.maximumf %5, %6 : vector<16x64xf32>
    %c2 = arith.constant 2 : index
    %c8 = arith.constant 8 : index
    %8 = vector.load %arg6[%c2, %c8] : memref<40x80xf32, #tpu.memory_space<vmem>>, vector<16x64xf32>
    tpu.vector_store %arg6[%c2, %c8], %7 {strides = array<i32>} : memref<40x80xf32, #tpu.memory_space<vmem>>, vector<16x64xf32>,
    %c0_7 = arith.constant 0 : index
    %c0_8 = arith.constant 0 : index
    %9 = vector.load %arg6[%c0_7, %c0_8] : memref<40x80xf32, #tpu.memory_space<vmem>>, vector<20x80xf32>
    %10 = vector.extract_strided_slice %9 {offsets = [0, 0], sizes = [16, 80], strides = [1, 1]} : vector<20x80xf32> to vector<16x80xf32>
    %11 = vector.extract_strided_slice %10 {offsets = [0, 0], sizes = [16, 64], strides = [1, 1]} : vector<16x80xf32> to vector<16x64xf32>
    %12 = vector.extract_strided_slice %3 {offsets = [0, 0], sizes = [1, 64], strides = [1, 1]} : vector<25x64xf32> to vector<1x64xf32>
    %13 = vector.shape_cast %12 : vector<1x64xf32> to vector<64xf32>
    %14 = vector.shape_cast %13 : vector<64xf32> to vector<1x64xf32>
    %15 = vector.broadcast %14 : vector<1x64xf32> to vector<16x64xf32>
    %16 = arith.mulf %11, %15 : vector<16x64xf32>
    %17 = vector.extract_strided_slice %10 {offsets = [0, 4], sizes = [16, 64], strides = [1, 1]} : vector<16x80xf32> to vector<16x64xf32>
    %18 = vector.extract_strided_slice %3 {offsets = [1, 0], sizes = [1, 64], strides = [1, 1]} : vector<25x64xf32> to vector<1x64xf32>
    %19 = vector.shape_cast %18 : vector<1x64xf32> to vector<64xf32>
    %20 = vector.shape_cast %19 : vector<64xf32> to vector<1x64xf32>
    %21 = vector.broadcast %20 : vector<1x64xf32> to vector<16x64xf32>
    %22 = arith.mulf %17, %21 : vector<16x64xf32>
    %23 = arith.addf %16, %22 : vector<16x64xf32>
    %24 = vector.extract_strided_slice %10 {offsets = [0, 8], sizes = [16, 64], strides = [1, 1]} : vector<16x80xf32> to vector<16x64xf32>
    %25 = vector.extract_strided_slice %3 {offsets = [2, 0], sizes = [1, 64], strides = [1, 1]} : vector<25x64xf32> to vector<1x64xf32>
    %26 = vector.shape_cast %25 : vector<1x64xf32> to vector<64xf32>
    %27 = vector.shape_cast %26 : vector<64xf32> to vector<1x64xf32>
    %28 = vector.broadcast %27 : vector<1x64xf32> to vector<16x64xf32>
    %29 = arith.mulf %24, %28 : vector<16x64xf32>
    %30 = arith.addf %23, %29 : vector<16x64xf32>
    %31 = vector.extract_strided_slice %10 {offsets = [0, 12], sizes = [16, 64], strides = [1, 1]} : vector<16x80xf32> to vector<16x64xf32>
    %32 = vector.extract_strided_slice %3 {offsets = [3, 0], sizes = [1, 64], strides = [1, 1]} : vector<25x64xf32> to vector<1x64xf32>
    %33 = vector.shape_cast %32 : vector<1x64xf32> to vector<64xf32>
    %34 = vector.shape_cast %33 : vector<64xf32> to vector<1x64xf32>
    %35 = vector.broadcast %34 : vector<1x64xf32> to vector<16x64xf32>
    %36 = arith.mulf %31, %35 : vector<16x64xf32>
    %37 = arith.addf %30, %36 : vector<16x64xf32>
    %38 = vector.extract_strided_slice %10 {offsets = [0, 16], sizes = [16, 64], strides = [1, 1]} : vector<16x80xf32> to vector<16x64xf32>
    %39 = vector.extract_strided_slice %3 {offsets = [4, 0], sizes = [1, 64], strides = [1, 1]} : vector<25x64xf32> to vector<1x64xf32>
    %40 = vector.shape_cast %39 : vector<1x64xf32> to vector<64xf32>
    %41 = vector.shape_cast %40 : vector<64xf32> to vector<1x64xf32>
    %42 = vector.broadcast %41 : vector<1x64xf32> to vector<16x64xf32>
    %43 = arith.mulf %38, %42 : vector<16x64xf32>
    %44 = arith.addf %37, %43 : vector<16x64xf32>
    %45 = vector.extract_strided_slice %9 {offsets = [1, 0], sizes = [16, 80], strides = [1, 1]} : vector<20x80xf32> to vector<16x80xf32>
    %46 = vector.extract_strided_slice %45 {offsets = [0, 0], sizes = [16, 64], strides = [1, 1]} : vector<16x80xf32> to vector<16x64xf32>
    %47 = vector.extract_strided_slice %3 {offsets = [5, 0], sizes = [1, 64], strides = [1, 1]} : vector<25x64xf32> to vector<1x64xf32>
    %48 = vector.shape_cast %47 : vector<1x64xf32> to vector<64xf32>
    %49 = vector.shape_cast %48 : vector<64xf32> to vector<1x64xf32>
    %50 = vector.broadcast %49 : vector<1x64xf32> to vector<16x64xf32>
    %51 = arith.mulf %46, %50 : vector<16x64xf32>
    %52 = vector.extract_strided_slice %45 {offsets = [0, 4], sizes = [16, 64], strides = [1, 1]} : vector<16x80xf32> to vector<16x64xf32>
    %53 = vector.extract_strided_slice %3 {offsets = [6, 0], sizes = [1, 64], strides = [1, 1]} : vector<25x64xf32> to vector<1x64xf32>
    %54 = vector.shape_cast %53 : vector<1x64xf32> to vector<64xf32>
    %55 = vector.shape_cast %54 : vector<64xf32> to vector<1x64xf32>
    %56 = vector.broadcast %55 : vector<1x64xf32> to vector<16x64xf32>
    %57 = arith.mulf %52, %56 : vector<16x64xf32>
    %58 = arith.addf %51, %57 : vector<16x64xf32>
    %59 = vector.extract_strided_slice %45 {offsets = [0, 8], sizes = [16, 64], strides = [1, 1]} : vector<16x80xf32> to vector<16x64xf32>
    %60 = vector.extract_strided_slice %3 {offsets = [7, 0], sizes = [1, 64], strides = [1, 1]} : vector<25x64xf32> to vector<1x64xf32>
    %61 = vector.shape_cast %60 : vector<1x64xf32> to vector<64xf32>
    %62 = vector.shape_cast %61 : vector<64xf32> to vector<1x64xf32>
    %63 = vector.broadcast %62 : vector<1x64xf32> to vector<16x64xf32>
    %64 = arith.mulf %59, %63 : vector<16x64xf32>
    %65 = arith.addf %58, %64 : vector<16x64xf32>
    %66 = vector.extract_strided_slice %45 {offsets = [0, 12], sizes = [16, 64], strides = [1, 1]} : vector<16x80xf32> to vector<16x64xf32>
    %67 = vector.extract_strided_slice %3 {offsets = [8, 0], sizes = [1, 64], strides = [1, 1]} : vector<25x64xf32> to vector<1x64xf32>
    %68 = vector.shape_cast %67 : vector<1x64xf32> to vector<64xf32>
    %69 = vector.shape_cast %68 : vector<64xf32> to vector<1x64xf32>
    %70 = vector.broadcast %69 : vector<1x64xf32> to vector<16x64xf32>
    %71 = arith.mulf %66, %70 : vector<16x64xf32>
    %72 = arith.addf %65, %71 : vector<16x64xf32>
    %73 = vector.extract_strided_slice %45 {offsets = [0, 16], sizes = [16, 64], strides = [1, 1]} : vector<16x80xf32> to vector<16x64xf32>
    %74 = vector.extract_strided_slice %3 {offsets = [9, 0], sizes = [1, 64], strides = [1, 1]} : vector<25x64xf32> to vector<1x64xf32>
    %75 = vector.shape_cast %74 : vector<1x64xf32> to vector<64xf32>
    %76 = vector.shape_cast %75 : vector<64xf32> to vector<1x64xf32>
    %77 = vector.broadcast %76 : vector<1x64xf32> to vector<16x64xf32>
    %78 = arith.mulf %73, %77 : vector<16x64xf32>
    %79 = arith.addf %72, %78 : vector<16x64xf32>
    %80 = vector.extract_strided_slice %9 {offsets = [2, 0], sizes = [16, 80], strides = [1, 1]} : vector<20x80xf32> to vector<16x80xf32>
    %81 = vector.extract_strided_slice %80 {offsets = [0, 0], sizes = [16, 64], strides = [1, 1]} : vector<16x80xf32> to vector<16x64xf32>
    %82 = vector.extract_strided_slice %3 {offsets = [10, 0], sizes = [1, 64], strides = [1, 1]} : vector<25x64xf32> to vector<1x64xf32>
    %83 = vector.shape_cast %82 : vector<1x64xf32> to vector<64xf32>
    %84 = vector.shape_cast %83 : vector<64xf32> to vector<1x64xf32>
    %85 = vector.broadcast %84 : vector<1x64xf32> to vector<16x64xf32>
    %86 = arith.mulf %81, %85 : vector<16x64xf32>
    %87 = vector.extract_strided_slice %80 {offsets = [0, 4], sizes = [16, 64], strides = [1, 1]} : vector<16x80xf32> to vector<16x64xf32>
    %88 = vector.extract_strided_slice %3 {offsets = [11, 0], sizes = [1, 64], strides = [1, 1]} : vector<25x64xf32> to vector<1x64xf32>
    %89 = vector.shape_cast %88 : vector<1x64xf32> to vector<64xf32>
    %90 = vector.shape_cast %89 : vector<64xf32> to vector<1x64xf32>
    %91 = vector.broadcast %90 : vector<1x64xf32> to vector<16x64xf32>
    %92 = arith.mulf %87, %91 : vector<16x64xf32>
    %93 = arith.addf %86, %92 : vector<16x64xf32>
    %94 = vector.extract_strided_slice %80 {offsets = [0, 8], sizes = [16, 64], strides = [1, 1]} : vector<16x80xf32> to vector<16x64xf32>
    %95 = vector.extract_strided_slice %3 {offsets = [12, 0], sizes = [1, 64], strides = [1, 1]} : vector<25x64xf32> to vector<1x64xf32>
    %96 = vector.shape_cast %95 : vector<1x64xf32> to vector<64xf32>
    %97 = vector.shape_cast %96 : vector<64xf32> to vector<1x64xf32>
    %98 = vector.broadcast %97 : vector<1x64xf32> to vector<16x64xf32>
    %99 = arith.mulf %94, %98 : vector<16x64xf32>
    %100 = arith.addf %93, %99 : vector<16x64xf32>
    %101 = vector.extract_strided_slice %80 {offsets = [0, 12], sizes = [16, 64], strides = [1, 1]} : vector<16x80xf32> to vector<16x64xf32>
    %102 = vector.extract_strided_slice %3 {offsets = [13, 0], sizes = [1, 64], strides = [1, 1]} : vector<25x64xf32> to vector<1x64xf32>
    %103 = vector.shape_cast %102 : vector<1x64xf32> to vector<64xf32>
    %104 = vector.shape_cast %103 : vector<64xf32> to vector<1x64xf32>
    %105 = vector.broadcast %104 : vector<1x64xf32> to vector<16x64xf32>
    %106 = arith.mulf %101, %105 : vector<16x64xf32>
    %107 = arith.addf %100, %106 : vector<16x64xf32>
    %108 = vector.extract_strided_slice %80 {offsets = [0, 16], sizes = [16, 64], strides = [1, 1]} : vector<16x80xf32> to vector<16x64xf32>
    %109 = vector.extract_strided_slice %3 {offsets = [14, 0], sizes = [1, 64], strides = [1, 1]} : vector<25x64xf32> to vector<1x64xf32>
    %110 = vector.shape_cast %109 : vector<1x64xf32> to vector<64xf32>
    %111 = vector.shape_cast %110 : vector<64xf32> to vector<1x64xf32>
    %112 = vector.broadcast %111 : vector<1x64xf32> to vector<16x64xf32>
    %113 = arith.mulf %108, %112 : vector<16x64xf32>
    %114 = arith.addf %107, %113 : vector<16x64xf32>
    %115 = vector.extract_strided_slice %9 {offsets = [3, 0], sizes = [16, 80], strides = [1, 1]} : vector<20x80xf32> to vector<16x80xf32>
    %116 = vector.extract_strided_slice %115 {offsets = [0, 0], sizes = [16, 64], strides = [1, 1]} : vector<16x80xf32> to vector<16x64xf32>
    %117 = vector.extract_strided_slice %3 {offsets = [15, 0], sizes = [1, 64], strides = [1, 1]} : vector<25x64xf32> to vector<1x64xf32>
    %118 = vector.shape_cast %117 : vector<1x64xf32> to vector<64xf32>
    %119 = vector.shape_cast %118 : vector<64xf32> to vector<1x64xf32>
    %120 = vector.broadcast %119 : vector<1x64xf32> to vector<16x64xf32>
    %121 = arith.mulf %116, %120 : vector<16x64xf32>
    %122 = vector.extract_strided_slice %115 {offsets = [0, 4], sizes = [16, 64], strides = [1, 1]} : vector<16x80xf32> to vector<16x64xf32>
    %123 = vector.extract_strided_slice %3 {offsets = [16, 0], sizes = [1, 64], strides = [1, 1]} : vector<25x64xf32> to vector<1x64xf32>
    %124 = vector.shape_cast %123 : vector<1x64xf32> to vector<64xf32>
    %125 = vector.shape_cast %124 : vector<64xf32> to vector<1x64xf32>
    %126 = vector.broadcast %125 : vector<1x64xf32> to vector<16x64xf32>
    %127 = arith.mulf %122, %126 : vector<16x64xf32>
    %128 = arith.addf %121, %127 : vector<16x64xf32>
    %129 = vector.extract_strided_slice %115 {offsets = [0, 8], sizes = [16, 64], strides = [1, 1]} : vector<16x80xf32> to vector<16x64xf32>
    %130 = vector.extract_strided_slice %3 {offsets = [17, 0], sizes = [1, 64], strides = [1, 1]} : vector<25x64xf32> to vector<1x64xf32>
    %131 = vector.shape_cast %130 : vector<1x64xf32> to vector<64xf32>
    %132 = vector.shape_cast %131 : vector<64xf32> to vector<1x64xf32>
    %133 = vector.broadcast %132 : vector<1x64xf32> to vector<16x64xf32>
    %134 = arith.mulf %129, %133 : vector<16x64xf32>
    %135 = arith.addf %128, %134 : vector<16x64xf32>
    %136 = vector.extract_strided_slice %115 {offsets = [0, 12], sizes = [16, 64], strides = [1, 1]} : vector<16x80xf32> to vector<16x64xf32>
    %137 = vector.extract_strided_slice %3 {offsets = [18, 0], sizes = [1, 64], strides = [1, 1]} : vector<25x64xf32> to vector<1x64xf32>
    %138 = vector.shape_cast %137 : vector<1x64xf32> to vector<64xf32>
    %139 = vector.shape_cast %138 : vector<64xf32> to vector<1x64xf32>
    %140 = vector.broadcast %139 : vector<1x64xf32> to vector<16x64xf32>
    %141 = arith.mulf %136, %140 : vector<16x64xf32>
    %142 = arith.addf %135, %141 : vector<16x64xf32>
    %143 = vector.extract_strided_slice %115 {offsets = [0, 16], sizes = [16, 64], strides = [1, 1]} : vector<16x80xf32> to vector<16x64xf32>
    %144 = vector.extract_strided_slice %3 {offsets = [19, 0], sizes = [1, 64], strides = [1, 1]} : vector<25x64xf32> to vector<1x64xf32>
    %145 = vector.shape_cast %144 : vector<1x64xf32> to vector<64xf32>
    %146 = vector.shape_cast %145 : vector<64xf32> to vector<1x64xf32>
    %147 = vector.broadcast %146 : vector<1x64xf32> to vector<16x64xf32>
    %148 = arith.mulf %143, %147 : vector<16x64xf32>
    %149 = arith.addf %142, %148 : vector<16x64xf32>
    %150 = vector.extract_strided_slice %9 {offsets = [4, 0], sizes = [16, 80], strides = [1, 1]} : vector<20x80xf32> to vector<16x80xf32>
    %151 = vector.extract_strided_slice %150 {offsets = [0, 0], sizes = [16, 64], strides = [1, 1]} : vector<16x80xf32> to vector<16x64xf32>
    %152 = vector.extract_strided_slice %3 {offsets = [20, 0], sizes = [1, 64], strides = [1, 1]} : vector<25x64xf32> to vector<1x64xf32>
    %153 = vector.shape_cast %152 : vector<1x64xf32> to vector<64xf32>
    %154 = vector.shape_cast %153 : vector<64xf32> to vector<1x64xf32>
    %155 = vector.broadcast %154 : vector<1x64xf32> to vector<16x64xf32>
    %156 = arith.mulf %151, %155 : vector<16x64xf32>
    %157 = vector.extract_strided_slice %150 {offsets = [0, 4], sizes = [16, 64], strides = [1, 1]} : vector<16x80xf32> to vector<16x64xf32>
    %158 = vector.extract_strided_slice %3 {offsets = [21, 0], sizes = [1, 64], strides = [1, 1]} : vector<25x64xf32> to vector<1x64xf32>
    %159 = vector.shape_cast %158 : vector<1x64xf32> to vector<64xf32>
    %160 = vector.shape_cast %159 : vector<64xf32> to vector<1x64xf32>
    %161 = vector.broadcast %160 : vector<1x64xf32> to vector<16x64xf32>
    %162 = arith.mulf %157, %161 : vector<16x64xf32>
    %163 = arith.addf %156, %162 : vector<16x64xf32>
    %164 = vector.extract_strided_slice %150 {offsets = [0, 8], sizes = [16, 64], strides = [1, 1]} : vector<16x80xf32> to vector<16x64xf32>
    %165 = vector.extract_strided_slice %3 {offsets = [22, 0], sizes = [1, 64], strides = [1, 1]} : vector<25x64xf32> to vector<1x64xf32>
    %166 = vector.shape_cast %165 : vector<1x64xf32> to vector<64xf32>
    %167 = vector.shape_cast %166 : vector<64xf32> to vector<1x64xf32>
    %168 = vector.broadcast %167 : vector<1x64xf32> to vector<16x64xf32>
    %169 = arith.mulf %164, %168 : vector<16x64xf32>
    %170 = arith.addf %163, %169 : vector<16x64xf32>
    %171 = vector.extract_strided_slice %150 {offsets = [0, 12], sizes = [16, 64], strides = [1, 1]} : vector<16x80xf32> to vector<16x64xf32>
    %172 = vector.extract_strided_slice %3 {offsets = [23, 0], sizes = [1, 64], strides = [1, 1]} : vector<25x64xf32> to vector<1x64xf32>
    %173 = vector.shape_cast %172 : vector<1x64xf32> to vector<64xf32>
    %174 = vector.shape_cast %173 : vector<64xf32> to vector<1x64xf32>
    %175 = vector.broadcast %174 : vector<1x64xf32> to vector<16x64xf32>
    %176 = arith.mulf %171, %175 : vector<16x64xf32>
    %177 = arith.addf %170, %176 : vector<16x64xf32>
    %178 = vector.extract_strided_slice %150 {offsets = [0, 16], sizes = [16, 64], strides = [1, 1]} : vector<16x80xf32> to vector<16x64xf32>
    %179 = vector.extract_strided_slice %3 {offsets = [24, 0], sizes = [1, 64], strides = [1, 1]} : vector<25x64xf32> to vector<1x64xf32>
    %180 = vector.shape_cast %179 : vector<1x64xf32> to vector<64xf32>
    %181 = vector.shape_cast %180 : vector<64xf32> to vector<1x64xf32>
    %182 = vector.broadcast %181 : vector<1x64xf32> to vector<16x64xf32>
    %183 = arith.mulf %178, %182 : vector<16x64xf32>
    %184 = arith.addf %177, %183 : vector<16x64xf32>
    %185 = arith.addf %44, %79 : vector<16x64xf32>
    %186 = arith.addf %114, %149 : vector<16x64xf32>
    %187 = arith.addf %185, %186 : vector<16x64xf32>
    %188 = arith.addf %187, %184 : vector<16x64xf32>
    %189 = arith.addf %188, %5 : vector<16x64xf32>
    %190 = vector.extract_strided_slice %0 {offsets = [1, 0, 0], sizes = [1, 16, 64], strides = [1, 1, 1]} : vector<2x16x64xf32> to vector<1x16x64xf32>
    %191 = vector.shape_cast %190 : vector<1x16x64xf32> to vector<16x64xf32>
    %cst_9 = arith.constant 0.000000e+00 : f32
    %192 = vector.broadcast %cst_9 : f32 to vector<16x64xf32>
    %193 = arith.maximumf %191, %192 : vector<16x64xf32>
    %c22 = arith.constant 22 : index
    %c8_10 = arith.constant 8 : index
    %194 = vector.load %arg6[%c22, %c8_10] : memref<40x80xf32, #tpu.memory_space<vmem>>, vector<16x64xf32>
    tpu.vector_store %arg6[%c22, %c8_10], %193 {strides = array<i32>} : memref<40x80xf32, #tpu.memory_space<vmem>>, vector<16x64xf32>,
    %c20 = arith.constant 20 : index
    %c0_11 = arith.constant 0 : index
    %195 = vector.load %arg6[%c20, %c0_11] : memref<40x80xf32, #tpu.memory_space<vmem>>, vector<20x80xf32>
    %196 = vector.extract_strided_slice %195 {offsets = [0, 0], sizes = [16, 80], strides = [1, 1]} : vector<20x80xf32> to vector<16x80xf32>
    %197 = vector.extract_strided_slice %196 {offsets = [0, 0], sizes = [16, 64], strides = [1, 1]} : vector<16x80xf32> to vector<16x64xf32>
    %198 = vector.extract_strided_slice %3 {offsets = [0, 0], sizes = [1, 64], strides = [1, 1]} : vector<25x64xf32> to vector<1x64xf32>
    %199 = vector.shape_cast %198 : vector<1x64xf32> to vector<64xf32>
    %200 = vector.shape_cast %199 : vector<64xf32> to vector<1x64xf32>
    %201 = vector.broadcast %200 : vector<1x64xf32> to vector<16x64xf32>
    %202 = arith.mulf %197, %201 : vector<16x64xf32>
    %203 = vector.extract_strided_slice %196 {offsets = [0, 4], sizes = [16, 64], strides = [1, 1]} : vector<16x80xf32> to vector<16x64xf32>
    %204 = vector.extract_strided_slice %3 {offsets = [1, 0], sizes = [1, 64], strides = [1, 1]} : vector<25x64xf32> to vector<1x64xf32>
    %205 = vector.shape_cast %204 : vector<1x64xf32> to vector<64xf32>
    %206 = vector.shape_cast %205 : vector<64xf32> to vector<1x64xf32>
    %207 = vector.broadcast %206 : vector<1x64xf32> to vector<16x64xf32>
    %208 = arith.mulf %203, %207 : vector<16x64xf32>
    %209 = arith.addf %202, %208 : vector<16x64xf32>
    %210 = vector.extract_strided_slice %196 {offsets = [0, 8], sizes = [16, 64], strides = [1, 1]} : vector<16x80xf32> to vector<16x64xf32>
    %211 = vector.extract_strided_slice %3 {offsets = [2, 0], sizes = [1, 64], strides = [1, 1]} : vector<25x64xf32> to vector<1x64xf32>
    %212 = vector.shape_cast %211 : vector<1x64xf32> to vector<64xf32>
    %213 = vector.shape_cast %212 : vector<64xf32> to vector<1x64xf32>
    %214 = vector.broadcast %213 : vector<1x64xf32> to vector<16x64xf32>
    %215 = arith.mulf %210, %214 : vector<16x64xf32>
    %216 = arith.addf %209, %215 : vector<16x64xf32>
    %217 = vector.extract_strided_slice %196 {offsets = [0, 12], sizes = [16, 64], strides = [1, 1]} : vector<16x80xf32> to vector<16x64xf32>
    %218 = vector.extract_strided_slice %3 {offsets = [3, 0], sizes = [1, 64], strides = [1, 1]} : vector<25x64xf32> to vector<1x64xf32>
    %219 = vector.shape_cast %218 : vector<1x64xf32> to vector<64xf32>
    %220 = vector.shape_cast %219 : vector<64xf32> to vector<1x64xf32>
    %221 = vector.broadcast %220 : vector<1x64xf32> to vector<16x64xf32>
    %222 = arith.mulf %217, %221 : vector<16x64xf32>
    %223 = arith.addf %216, %222 : vector<16x64xf32>
    %224 = vector.extract_strided_slice %196 {offsets = [0, 16], sizes = [16, 64], strides = [1, 1]} : vector<16x80xf32> to vector<16x64xf32>
    %225 = vector.extract_strided_slice %3 {offsets = [4, 0], sizes = [1, 64], strides = [1, 1]} : vector<25x64xf32> to vector<1x64xf32>
    %226 = vector.shape_cast %225 : vector<1x64xf32> to vector<64xf32>
    %227 = vector.shape_cast %226 : vector<64xf32> to vector<1x64xf32>
    %228 = vector.broadcast %227 : vector<1x64xf32> to vector<16x64xf32>
    %229 = arith.mulf %224, %228 : vector<16x64xf32>
    %230 = arith.addf %223, %229 : vector<16x64xf32>
    %231 = vector.extract_strided_slice %195 {offsets = [1, 0], sizes = [16, 80], strides = [1, 1]} : vector<20x80xf32> to vector<16x80xf32>
    %232 = vector.extract_strided_slice %231 {offsets = [0, 0], sizes = [16, 64], strides = [1, 1]} : vector<16x80xf32> to vector<16x64xf32>
    %233 = vector.extract_strided_slice %3 {offsets = [5, 0], sizes = [1, 64], strides = [1, 1]} : vector<25x64xf32> to vector<1x64xf32>
    %234 = vector.shape_cast %233 : vector<1x64xf32> to vector<64xf32>
    %235 = vector.shape_cast %234 : vector<64xf32> to vector<1x64xf32>
    %236 = vector.broadcast %235 : vector<1x64xf32> to vector<16x64xf32>
    %237 = arith.mulf %232, %236 : vector<16x64xf32>
    %238 = vector.extract_strided_slice %231 {offsets = [0, 4], sizes = [16, 64], strides = [1, 1]} : vector<16x80xf32> to vector<16x64xf32>
    %239 = vector.extract_strided_slice %3 {offsets = [6, 0], sizes = [1, 64], strides = [1, 1]} : vector<25x64xf32> to vector<1x64xf32>
    %240 = vector.shape_cast %239 : vector<1x64xf32> to vector<64xf32>
    %241 = vector.shape_cast %240 : vector<64xf32> to vector<1x64xf32>
    %242 = vector.broadcast %241 : vector<1x64xf32> to vector<16x64xf32>
    %243 = arith.mulf %238, %242 : vector<16x64xf32>
    %244 = arith.addf %237, %243 : vector<16x64xf32>
    %245 = vector.extract_strided_slice %231 {offsets = [0, 8], sizes = [16, 64], strides = [1, 1]} : vector<16x80xf32> to vector<16x64xf32>
    %246 = vector.extract_strided_slice %3 {offsets = [7, 0], sizes = [1, 64], strides = [1, 1]} : vector<25x64xf32> to vector<1x64xf32>
    %247 = vector.shape_cast %246 : vector<1x64xf32> to vector<64xf32>
    %248 = vector.shape_cast %247 : vector<64xf32> to vector<1x64xf32>
    %249 = vector.broadcast %248 : vector<1x64xf32> to vector<16x64xf32>
    %250 = arith.mulf %245, %249 : vector<16x64xf32>
    %251 = arith.addf %244, %250 : vector<16x64xf32>
    %252 = vector.extract_strided_slice %231 {offsets = [0, 12], sizes = [16, 64], strides = [1, 1]} : vector<16x80xf32> to vector<16x64xf32>
    %253 = vector.extract_strided_slice %3 {offsets = [8, 0], sizes = [1, 64], strides = [1, 1]} : vector<25x64xf32> to vector<1x64xf32>
    %254 = vector.shape_cast %253 : vector<1x64xf32> to vector<64xf32>
    %255 = vector.shape_cast %254 : vector<64xf32> to vector<1x64xf32>
    %256 = vector.broadcast %255 : vector<1x64xf32> to vector<16x64xf32>
    %257 = arith.mulf %252, %256 : vector<16x64xf32>
    %258 = arith.addf %251, %257 : vector<16x64xf32>
    %259 = vector.extract_strided_slice %231 {offsets = [0, 16], sizes = [16, 64], strides = [1, 1]} : vector<16x80xf32> to vector<16x64xf32>
    %260 = vector.extract_strided_slice %3 {offsets = [9, 0], sizes = [1, 64], strides = [1, 1]} : vector<25x64xf32> to vector<1x64xf32>
    %261 = vector.shape_cast %260 : vector<1x64xf32> to vector<64xf32>
    %262 = vector.shape_cast %261 : vector<64xf32> to vector<1x64xf32>
    %263 = vector.broadcast %262 : vector<1x64xf32> to vector<16x64xf32>
    %264 = arith.mulf %259, %263 : vector<16x64xf32>
    %265 = arith.addf %258, %264 : vector<16x64xf32>
    %266 = vector.extract_strided_slice %195 {offsets = [2, 0], sizes = [16, 80], strides = [1, 1]} : vector<20x80xf32> to vector<16x80xf32>
    %267 = vector.extract_strided_slice %266 {offsets = [0, 0], sizes = [16, 64], strides = [1, 1]} : vector<16x80xf32> to vector<16x64xf32>
    %268 = vector.extract_strided_slice %3 {offsets = [10, 0], sizes = [1, 64], strides = [1, 1]} : vector<25x64xf32> to vector<1x64xf32>
    %269 = vector.shape_cast %268 : vector<1x64xf32> to vector<64xf32>
    %270 = vector.shape_cast %269 : vector<64xf32> to vector<1x64xf32>
    %271 = vector.broadcast %270 : vector<1x64xf32> to vector<16x64xf32>
    %272 = arith.mulf %267, %271 : vector<16x64xf32>
    %273 = vector.extract_strided_slice %266 {offsets = [0, 4], sizes = [16, 64], strides = [1, 1]} : vector<16x80xf32> to vector<16x64xf32>
    %274 = vector.extract_strided_slice %3 {offsets = [11, 0], sizes = [1, 64], strides = [1, 1]} : vector<25x64xf32> to vector<1x64xf32>
    %275 = vector.shape_cast %274 : vector<1x64xf32> to vector<64xf32>
    %276 = vector.shape_cast %275 : vector<64xf32> to vector<1x64xf32>
    %277 = vector.broadcast %276 : vector<1x64xf32> to vector<16x64xf32>
    %278 = arith.mulf %273, %277 : vector<16x64xf32>
    %279 = arith.addf %272, %278 : vector<16x64xf32>
    %280 = vector.extract_strided_slice %266 {offsets = [0, 8], sizes = [16, 64], strides = [1, 1]} : vector<16x80xf32> to vector<16x64xf32>
    %281 = vector.extract_strided_slice %3 {offsets = [12, 0], sizes = [1, 64], strides = [1, 1]} : vector<25x64xf32> to vector<1x64xf32>
    %282 = vector.shape_cast %281 : vector<1x64xf32> to vector<64xf32>
    %283 = vector.shape_cast %282 : vector<64xf32> to vector<1x64xf32>
    %284 = vector.broadcast %283 : vector<1x64xf32> to vector<16x64xf32>
    %285 = arith.mulf %280, %284 : vector<16x64xf32>
    %286 = arith.addf %279, %285 : vector<16x64xf32>
    %287 = vector.extract_strided_slice %266 {offsets = [0, 12], sizes = [16, 64], strides = [1, 1]} : vector<16x80xf32> to vector<16x64xf32>
    %288 = vector.extract_strided_slice %3 {offsets = [13, 0], sizes = [1, 64], strides = [1, 1]} : vector<25x64xf32> to vector<1x64xf32>
    %289 = vector.shape_cast %288 : vector<1x64xf32> to vector<64xf32>
    %290 = vector.shape_cast %289 : vector<64xf32> to vector<1x64xf32>
    %291 = vector.broadcast %290 : vector<1x64xf32> to vector<16x64xf32>
    %292 = arith.mulf %287, %291 : vector<16x64xf32>
    %293 = arith.addf %286, %292 : vector<16x64xf32>
    %294 = vector.extract_strided_slice %266 {offsets = [0, 16], sizes = [16, 64], strides = [1, 1]} : vector<16x80xf32> to vector<16x64xf32>
    %295 = vector.extract_strided_slice %3 {offsets = [14, 0], sizes = [1, 64], strides = [1, 1]} : vector<25x64xf32> to vector<1x64xf32>
    %296 = vector.shape_cast %295 : vector<1x64xf32> to vector<64xf32>
    %297 = vector.shape_cast %296 : vector<64xf32> to vector<1x64xf32>
    %298 = vector.broadcast %297 : vector<1x64xf32> to vector<16x64xf32>
    %299 = arith.mulf %294, %298 : vector<16x64xf32>
    %300 = arith.addf %293, %299 : vector<16x64xf32>
    %301 = vector.extract_strided_slice %195 {offsets = [3, 0], sizes = [16, 80], strides = [1, 1]} : vector<20x80xf32> to vector<16x80xf32>
    %302 = vector.extract_strided_slice %301 {offsets = [0, 0], sizes = [16, 64], strides = [1, 1]} : vector<16x80xf32> to vector<16x64xf32>
    %303 = vector.extract_strided_slice %3 {offsets = [15, 0], sizes = [1, 64], strides = [1, 1]} : vector<25x64xf32> to vector<1x64xf32>
    %304 = vector.shape_cast %303 : vector<1x64xf32> to vector<64xf32>
    %305 = vector.shape_cast %304 : vector<64xf32> to vector<1x64xf32>
    %306 = vector.broadcast %305 : vector<1x64xf32> to vector<16x64xf32>
    %307 = arith.mulf %302, %306 : vector<16x64xf32>
    %308 = vector.extract_strided_slice %301 {offsets = [0, 4], sizes = [16, 64], strides = [1, 1]} : vector<16x80xf32> to vector<16x64xf32>
    %309 = vector.extract_strided_slice %3 {offsets = [16, 0], sizes = [1, 64], strides = [1, 1]} : vector<25x64xf32> to vector<1x64xf32>
    %310 = vector.shape_cast %309 : vector<1x64xf32> to vector<64xf32>
    %311 = vector.shape_cast %310 : vector<64xf32> to vector<1x64xf32>
    %312 = vector.broadcast %311 : vector<1x64xf32> to vector<16x64xf32>
    %313 = arith.mulf %308, %312 : vector<16x64xf32>
    %314 = arith.addf %307, %313 : vector<16x64xf32>
    %315 = vector.extract_strided_slice %301 {offsets = [0, 8], sizes = [16, 64], strides = [1, 1]} : vector<16x80xf32> to vector<16x64xf32>
    %316 = vector.extract_strided_slice %3 {offsets = [17, 0], sizes = [1, 64], strides = [1, 1]} : vector<25x64xf32> to vector<1x64xf32>
    %317 = vector.shape_cast %316 : vector<1x64xf32> to vector<64xf32>
    %318 = vector.shape_cast %317 : vector<64xf32> to vector<1x64xf32>
    %319 = vector.broadcast %318 : vector<1x64xf32> to vector<16x64xf32>
    %320 = arith.mulf %315, %319 : vector<16x64xf32>
    %321 = arith.addf %314, %320 : vector<16x64xf32>
    %322 = vector.extract_strided_slice %301 {offsets = [0, 12], sizes = [16, 64], strides = [1, 1]} : vector<16x80xf32> to vector<16x64xf32>
    %323 = vector.extract_strided_slice %3 {offsets = [18, 0], sizes = [1, 64], strides = [1, 1]} : vector<25x64xf32> to vector<1x64xf32>
    %324 = vector.shape_cast %323 : vector<1x64xf32> to vector<64xf32>
    %325 = vector.shape_cast %324 : vector<64xf32> to vector<1x64xf32>
    %326 = vector.broadcast %325 : vector<1x64xf32> to vector<16x64xf32>
    %327 = arith.mulf %322, %326 : vector<16x64xf32>
    %328 = arith.addf %321, %327 : vector<16x64xf32>
    %329 = vector.extract_strided_slice %301 {offsets = [0, 16], sizes = [16, 64], strides = [1, 1]} : vector<16x80xf32> to vector<16x64xf32>
    %330 = vector.extract_strided_slice %3 {offsets = [19, 0], sizes = [1, 64], strides = [1, 1]} : vector<25x64xf32> to vector<1x64xf32>
    %331 = vector.shape_cast %330 : vector<1x64xf32> to vector<64xf32>
    %332 = vector.shape_cast %331 : vector<64xf32> to vector<1x64xf32>
    %333 = vector.broadcast %332 : vector<1x64xf32> to vector<16x64xf32>
    %334 = arith.mulf %329, %333 : vector<16x64xf32>
    %335 = arith.addf %328, %334 : vector<16x64xf32>
    %336 = vector.extract_strided_slice %195 {offsets = [4, 0], sizes = [16, 80], strides = [1, 1]} : vector<20x80xf32> to vector<16x80xf32>
    %337 = vector.extract_strided_slice %336 {offsets = [0, 0], sizes = [16, 64], strides = [1, 1]} : vector<16x80xf32> to vector<16x64xf32>
    %338 = vector.extract_strided_slice %3 {offsets = [20, 0], sizes = [1, 64], strides = [1, 1]} : vector<25x64xf32> to vector<1x64xf32>
    %339 = vector.shape_cast %338 : vector<1x64xf32> to vector<64xf32>
    %340 = vector.shape_cast %339 : vector<64xf32> to vector<1x64xf32>
    %341 = vector.broadcast %340 : vector<1x64xf32> to vector<16x64xf32>
    %342 = arith.mulf %337, %341 : vector<16x64xf32>
    %343 = vector.extract_strided_slice %336 {offsets = [0, 4], sizes = [16, 64], strides = [1, 1]} : vector<16x80xf32> to vector<16x64xf32>
    %344 = vector.extract_strided_slice %3 {offsets = [21, 0], sizes = [1, 64], strides = [1, 1]} : vector<25x64xf32> to vector<1x64xf32>
    %345 = vector.shape_cast %344 : vector<1x64xf32> to vector<64xf32>
    %346 = vector.shape_cast %345 : vector<64xf32> to vector<1x64xf32>
    %347 = vector.broadcast %346 : vector<1x64xf32> to vector<16x64xf32>
    %348 = arith.mulf %343, %347 : vector<16x64xf32>
    %349 = arith.addf %342, %348 : vector<16x64xf32>
    %350 = vector.extract_strided_slice %336 {offsets = [0, 8], sizes = [16, 64], strides = [1, 1]} : vector<16x80xf32> to vector<16x64xf32>
    %351 = vector.extract_strided_slice %3 {offsets = [22, 0], sizes = [1, 64], strides = [1, 1]} : vector<25x64xf32> to vector<1x64xf32>
    %352 = vector.shape_cast %351 : vector<1x64xf32> to vector<64xf32>
    %353 = vector.shape_cast %352 : vector<64xf32> to vector<1x64xf32>
    %354 = vector.broadcast %353 : vector<1x64xf32> to vector<16x64xf32>
    %355 = arith.mulf %350, %354 : vector<16x64xf32>
    %356 = arith.addf %349, %355 : vector<16x64xf32>
    %357 = vector.extract_strided_slice %336 {offsets = [0, 12], sizes = [16, 64], strides = [1, 1]} : vector<16x80xf32> to vector<16x64xf32>
    %358 = vector.extract_strided_slice %3 {offsets = [23, 0], sizes = [1, 64], strides = [1, 1]} : vector<25x64xf32> to vector<1x64xf32>
    %359 = vector.shape_cast %358 : vector<1x64xf32> to vector<64xf32>
    %360 = vector.shape_cast %359 : vector<64xf32> to vector<1x64xf32>
    %361 = vector.broadcast %360 : vector<1x64xf32> to vector<16x64xf32>
    %362 = arith.mulf %357, %361 : vector<16x64xf32>
    %363 = arith.addf %356, %362 : vector<16x64xf32>
    %364 = vector.extract_strided_slice %336 {offsets = [0, 16], sizes = [16, 64], strides = [1, 1]} : vector<16x80xf32> to vector<16x64xf32>
    %365 = vector.extract_strided_slice %3 {offsets = [24, 0], sizes = [1, 64], strides = [1, 1]} : vector<25x64xf32> to vector<1x64xf32>
    %366 = vector.shape_cast %365 : vector<1x64xf32> to vector<64xf32>
    %367 = vector.shape_cast %366 : vector<64xf32> to vector<1x64xf32>
    %368 = vector.broadcast %367 : vector<1x64xf32> to vector<16x64xf32>
    %369 = arith.mulf %364, %368 : vector<16x64xf32>
    %370 = arith.addf %363, %369 : vector<16x64xf32>
    %371 = arith.addf %230, %265 : vector<16x64xf32>
    %372 = arith.addf %300, %335 : vector<16x64xf32>
    %373 = arith.addf %371, %372 : vector<16x64xf32>
    %374 = arith.addf %373, %370 : vector<16x64xf32>
    %375 = arith.addf %374, %191 : vector<16x64xf32>
    %376 = tpu.concatenate %189, %375 in 0 : vector<16x64xf32>, vector<16x64xf32> -> vector<32x64xf32>
    %c0_12 = arith.constant 0 : index
    %c0_13 = arith.constant 0 : index
    %377 = vector.load %arg3[%c0_12, %c0_13] : memref<64x128xf32, #tpu.memory_space<vmem>>, vector<64x128xf32>
    %cst_14 = arith.constant dense<0.000000e+00> : vector<32x128xf32>
    %378 = tpu.matmul %376, %377, %cst_14 {dimension_numbers = #tpu.dot_dimension_numbers<[1], [0], [0], [1], [0, 0, 1, 1], [], []>} : vector<32x64xf32>, vector<64x128xf32>, vector<32x128xf32> -> vector<32x128xf32>
    %c0_15 = arith.constant 0 : index
    %c0_16 = arith.constant 0 : index
    %379 = vector.load %arg4[%c0_15, %c0_16] : memref<1x128xf32, #tpu.memory_space<vmem>>, vector<1x128xf32>
    %380 = vector.shape_cast %379 : vector<1x128xf32> to vector<128xf32>
    %381 = vector.shape_cast %380 : vector<128xf32> to vector<1x128xf32>
    %382 = vector.broadcast %381 : vector<1x128xf32> to vector<32x128xf32>
    %383 = arith.addf %378, %382 : vector<32x128xf32>
    %384 = vector.extract_strided_slice %383 {offsets = [0, 0], sizes = [16, 128], strides = [1, 1]} : vector<32x128xf32> to vector<16x128xf32>
    %c0_17 = arith.constant 0 : index
    %c0_18 = arith.constant 0 : index
    %c0_19 = arith.constant 0 : index
    %385 = vector.load %arg5[%c0_17, %c0_18, %c0_19] : memref<2x16x128xf32, #tpu.memory_space<vmem>>, vector<1x16x128xf32>
    %386 = vector.shape_cast %385 : vector<1x16x128xf32> to vector<16x128xf32>
    %387 = vector.shape_cast %384 : vector<16x128xf32> to vector<1x16x128xf32>
    tpu.vector_store %arg5[%c0_17, %c0_18, %c0_19], %387 {strides = array<i32>} : memref<2x16x128xf32, #tpu.memory_space<vmem>>, vector<1x16x128xf32>,
    %388 = vector.extract_strided_slice %383 {offsets = [16, 0], sizes = [16, 128], strides = [1, 1]} : vector<32x128xf32> to vector<16x128xf32>
    %c1 = arith.constant 1 : index
    %c0_20 = arith.constant 0 : index
    %c0_21 = arith.constant 0 : index
    %389 = vector.load %arg5[%c1, %c0_20, %c0_21] : memref<2x16x128xf32, #tpu.memory_space<vmem>>, vector<1x16x128xf32>
    %390 = vector.shape_cast %389 : vector<1x16x128xf32> to vector<16x128xf32>
    %391 = vector.shape_cast %388 : vector<16x128xf32> to vector<1x16x128xf32>
    tpu.vector_store %arg5[%c1, %c0_20, %c0_21], %391 {strides = array<i32>} : memref<2x16x128xf32, #tpu.memory_space<vmem>>, vector<1x16x128xf32>,
    return
  }
  func.func @transform_0(%arg0: i32) -> (i32, i32, i32) {
    %c0_i32 = arith.constant 0 : i32
    %c0_i32_0 = arith.constant 0 : i32
    %c0_i32_1 = arith.constant 0 : i32
    return %arg0, %c0_i32, %c0_i32_0 : i32, i32, i32
  }
  func.func @transform_1(%arg0: i32) -> (i32, i32) {
    %c0_i32 = arith.constant 0 : i32
    %c0_i32_0 = arith.constant 0 : i32
    %c0_i32_1 = arith.constant 0 : i32
    return %c0_i32, %c0_i32_0 : i32, i32
  }
  func.func @transform_2(%arg0: i32) -> (i32, i32) {
    %c0_i32 = arith.constant 0 : i32
    %c0_i32_0 = arith.constant 0 : i32
    %c0_i32_1 = arith.constant 0 : i32
    return %c0_i32, %c0_i32_0 : i32, i32
  }
  func.func @transform_3(%arg0: i32) -> (i32, i32) {
    %c0_i32 = arith.constant 0 : i32
    %c0_i32_0 = arith.constant 0 : i32
    %c0_i32_1 = arith.constant 0 : i32
    return %c0_i32, %c0_i32_0 : i32, i32
  }
  func.func @transform_4(%arg0: i32) -> (i32, i32, i32) {
    %c0_i32 = arith.constant 0 : i32
    %c0_i32_0 = arith.constant 0 : i32
    %c0_i32_1 = arith.constant 0 : i32
    return %arg0, %c0_i32, %c0_i32_0 : i32, i32, i32
  }
}

</mosaic_0001>

<llo_original>
// kernel: tpu_custom_call.1
$region0: #{tpu_custom_call.1}
  #allocation0 [shape = 'u32[]', space=smem, size = 0x4, offset = 0x4, fixed_abs, tag = 'smem constant byte address 0x4 - core index']
  #allocation1 [shape = 'u32[144,128]{1,0:T(1,128)}', space=vmem, size = 0x12000, scoped, tag = 'internal scratch']
  #allocation2 [shape = 'f32[40,80]{1,0:T(8,128)}', space=vmem, size = 0x5000, scoped, tag = 'scratch operand']
  %s0 = inlined_call_operand.hbm [shape: f32[2,16,64], index: 0, kind: input, shape index: {}]
  %s1 = inlined_call_operand.hbm [shape: f32[25,64], index: 1, kind: input, shape index: {}]
  %s2 = inlined_call_operand.hbm [shape: f32[64,128], index: 2, kind: input, shape index: {}]
  %s3 = inlined_call_operand.vmem [shape: f32[1,128], index: 3, kind: input, shape index: {}]
  %s4 = inlined_call_operand.hbm [shape: f32[2,16,128], index: 4, kind: output, shape index: {}]
  %s5 = sld [smem:[#allocation0]]
  $region38: #{tpu_custom_call.1} parent=0
    _
  %s7 = ssub.s32 1, %s5
  %s8 = scalar_select 0, %s7, %s5
  $region1: #{tpu_custom_call.1} parent=0
    #allocation3 [shape = 'u8[16384]{0}', space=vmem, size = 0x4000, scoped, tag = 'input window, operand 0, single buffered']
    #allocation4 [shape = 's32[1]{0}', space=sflag, size = 0x4, scoped, tag = 'scoped memory for tpu_custom_call.1']
    #allocation5 [shape = 's32[1]{0}', space=sflag, size = 0x4, scoped, tag = 'scoped memory for tpu_custom_call.1']
    #allocation6 [shape = 'u8[16384]{0}', space=vmem, size = 0x4000, scoped, tag = 'input window, operand 1, single buffered']
    #allocation7 [shape = 's32[1]{0}', space=sflag, size = 0x4, scoped, tag = 'scoped memory for tpu_custom_call.1']
    #allocation8 [shape = 'u8[32768]{0}', space=vmem, size = 0x8000, scoped, tag = 'input window, operand 2, single buffered']
    #allocation9 [shape = 'u8[16384]{0}', space=vmem, size = 0x4000, scoped, tag = 'output window, operand 0, single buffered']
    %9 = vsyncpa [#allocation4], 0
    %10 = vsyncpa [#allocation7], 0
    %11 = vsyncpa [#allocation5], 0
    // Predicated region
    $region2: #{tpu_custom_call.1} parent=1 // pred_check
      _
    $region3: #{tpu_custom_call.1} parent=1 // pred_check_branch
      %13 = sbr.rel (0) target = $region5
    $region4: #{tpu_custom_call.1} parent=1 // pred_region
      %s15 = ssub.s32 512, 512
      %16 = vsyncadd [#allocation4], %s15
      %s17 = sshll.u32 [#allocation3], 4
      %s18 = int_to_ptr.vmem [resolvable:$true] %s17
      %23 = dma.hbm_to_vmem [thread:$0]  %s0, 512, %s18, [#allocation4], 128, 128, 8
    $region5: #{tpu_custom_call.1} parent=1 // pred_fallthru
      _
    // Predicated region
    $region6: #{tpu_custom_call.1} parent=1 // pred_check
      _
    $region7: #{tpu_custom_call.1} parent=1 // pred_check_branch
      %25 = sbr.rel (0) target = $region9
    $region8: #{tpu_custom_call.1} parent=1 // pred_region
      %s27 = ssub.s32 512, 512
      %28 = vsyncadd [#allocation7], %s27
      %s29 = sshll.u32 [#allocation6], 4
      %s30 = int_to_ptr.vmem [resolvable:$true] %s29
      %35 = dma.hbm_to_vmem [thread:$0]  %s1, 512, %s30, [#allocation7], 128, 128, 8
    $region9: #{tpu_custom_call.1} parent=1 // pred_fallthru
      _
    // Predicated region
    $region10: #{tpu_custom_call.1} parent=1 // pred_check
      _
    $region11: #{tpu_custom_call.1} parent=1 // pred_check_branch
      %37 = sbr.rel (0) target = $region13
    $region12: #{tpu_custom_call.1} parent=1 // pred_region
      %s39 = ssub.s32 1024, 1024
      %40 = vsyncadd [#allocation7], %s39
      %s41 = sshll.u32 [#allocation8], 4
      %s42 = int_to_ptr.vmem [resolvable:$true] %s41
      %47 = dma.hbm_to_vmem [thread:$0]  %s2, 1024, %s42, [#allocation7], 128, 128, 8
    $region13: #{tpu_custom_call.1} parent=1 // pred_fallthru
      _
    // Predicated region
    $region14: #{tpu_custom_call.1} parent=1 // pred_check
      _
    $region15: #{tpu_custom_call.1} parent=1 // pred_check_branch
      %49 = sbr.rel (0) target = $region17
    $region16: #{tpu_custom_call.1} parent=1 // pred_region
      _
    $region17: #{tpu_custom_call.1} parent=1 // pred_fallthru
      _
    // Predicated region
    $region18: #{tpu_custom_call.1} parent=1 // pred_check
      _
    $region19: #{tpu_custom_call.1} parent=1 // pred_check_branch
      %51 = sbr.rel (0) target = $region21
    $region20: #{tpu_custom_call.1} parent=1 // pred_region
      %52 = dma.done [#allocation4], 512
    $region21: #{tpu_custom_call.1} parent=1 // pred_fallthru
      _
    // Predicated region
    $region22: #{tpu_custom_call.1} parent=1 // pred_check
      _
    $region23: #{tpu_custom_call.1} parent=1 // pred_check_branch
      %54 = sbr.rel (0) target = $region25
    $region24: #{tpu_custom_call.1} parent=1 // pred_region
      %55 = dma.done [#allocation7], 512
    $region25: #{tpu_custom_call.1} parent=1 // pred_fallthru
      _
    // Predicated region
    $region26: #{tpu_custom_call.1} parent=1 // pred_check
      _
    $region27: #{tpu_custom_call.1} parent=1 // pred_check_branch
      %57 = sbr.rel (0) target = $region29
    $region28: #{tpu_custom_call.1} parent=1 // pred_region
      %58 = dma.done [#allocation7], 1024
    $region29: #{tpu_custom_call.1} parent=1 // pred_fallthru
      _
    %v59 = vld [vmem:[#allocation3] sm:$0xff]
    %v60 = vld [vmem:[#allocation3 + $0x8] sm:$0xff]
    %v61 = vld [vmem:[#allocation3 + $0x10] sm:$0xff]
    %v62 = vld [vmem:[#allocation3 + $0x18] sm:$0xff]
    %vm63 = vcmask 654336
    %64 = vst.msk [vmem:[#allocation2] sm:$0xff] %vm63, 0.0
    %65 = vst.msk [vmem:[#allocation2 + $0x8] sm:$0xff] %vm63, 0.0
    %66 = vst.msk [vmem:[#allocation2 + $0x10] sm:$0xff] %vm63, 0.0
    %67 = vst.msk [vmem:[#allocation2 + $0x18] sm:$0xff] %vm63, 0.0
    %68 = vst.msk [vmem:[#allocation2 + $0x20] sm:$0xff] %vm63, 0.0
    %v69 = vld [vmem:[#allocation6] sm:$0xff]
    %v70 = vld [vmem:[#allocation6 + $0x8] sm:$0xff]
    %v71 = vld [vmem:[#allocation6 + $0x10] sm:$0xff]
    %v72 = vld [vmem:[#allocation6 + $0x18] sm:$0x1]
    %v73 = vmax.f32 %v59, 0.0
    %v74 = vmax.f32 %v60, 0.0
    %77 = vrot.lane.b32.xlu0 %v73, 8
    %v78 = vpop.permute.xlu0 %77
    %79 = vrot.lane.b32.xlu0 %v74, 8
    %v80 = vpop.permute.xlu0 %79
    %vm83 = vcmask 588864
    %84 = vst.msk [vmem:[#allocation2 + $0x2] sm:$0xff] %vm83, %v78
    %85 = vst.msk [vmem:[#allocation2 + $0xa] sm:$0xff] %vm83, %v80
    %v86 = vld [vmem:[#allocation2] sm:$0xff]
    %v87 = vld [vmem:[#allocation2 + $0x8] sm:$0xff]
    %v88 = vld [vmem:[#allocation2 + $0x10] sm:$0xf]
    %v89 = vlaneseq
    %v90 = vshrl.u32 %v89, 7
    %v91 = vsub.s32 0, %v90
    %v92 = vrot.slane %v69, %v91
    %v93 = vmul.f32 %v86, %v92
    %v94 = vmul.f32 %v87, %v92
    %v95 = vlaneseq
    %v96 = vshrl.u32 %v95, 7
    %v97 = vsub.s32 1, %v96
    %v98 = vrot.slane %v69, %v97
    %100 = vrot.lane.b32.xlu0 %v98, 4
    %v101 = vpop.permute.xlu0 %100
    %v103 = vmul.f32 %v86, %v101
    %v104 = vmul.f32 %v87, %v101
    %107 = vrot.lane.b32.xlu0 %v103, 124
    %v108 = vpop.permute.xlu0 %107
    %109 = vrot.lane.b32.xlu0 %v104, 124
    %v110 = vpop.permute.xlu0 %109
    %v113 = vadd.f32 %v93, %v108
    %v114 = vadd.f32 %v94, %v110
    %v115 = vlaneseq
    %v116 = vshrl.u32 %v115, 7
    %v117 = vsub.s32 2, %v116
    %v118 = vrot.slane %v69, %v117
    %120 = vrot.lane.b32.xlu0 %v118, 8
    %v121 = vpop.permute.xlu0 %120
    %v123 = vmul.f32 %v86, %v121
    %v124 = vmul.f32 %v87, %v121
    %127 = vrot.lane.b32.xlu0 %v123, 120
    %v128 = vpop.permute.xlu0 %127
    %129 = vrot.lane.b32.xlu0 %v124, 120
    %v130 = vpop.permute.xlu0 %129
    %v133 = vadd.f32 %v113, %v128
    %v134 = vadd.f32 %v114, %v130
    %v135 = vlaneseq
    %v136 = vshrl.u32 %v135, 7
    %v137 = vsub.s32 3, %v136
    %v138 = vrot.slane %v69, %v137
    %140 = vrot.lane.b32.xlu0 %v138, 12
    %v141 = vpop.permute.xlu0 %140
    %v143 = vmul.f32 %v86, %v141
    %v144 = vmul.f32 %v87, %v141
    %147 = vrot.lane.b32.xlu0 %v143, 116
    %v148 = vpop.permute.xlu0 %147
    %149 = vrot.lane.b32.xlu0 %v144, 116
    %v150 = vpop.permute.xlu0 %149
    %v153 = vadd.f32 %v133, %v148
    %v154 = vadd.f32 %v134, %v150
    %v155 = vlaneseq
    %v156 = vshrl.u32 %v155, 7
    %v157 = vsub.s32 4, %v156
    %v158 = vrot.slane %v69, %v157
    %160 = vrot.lane.b32.xlu0 %v158, 16
    %v161 = vpop.permute.xlu0 %160
    %v163 = vmul.f32 %v86, %v161
    %v164 = vmul.f32 %v87, %v161
    %167 = vrot.lane.b32.xlu0 %v163, 112
    %v168 = vpop.permute.xlu0 %167
    %169 = vrot.lane.b32.xlu0 %v164, 112
    %v170 = vpop.permute.xlu0 %169
    %v173 = vadd.f32 %v153, %v168
    %v174 = vadd.f32 %v154, %v170
    %v175 = vlaneseq
    %v176 = vshrl.u32 %v175, 7
    %v177 = vsub.s32 5, %v176
    %v178 = vrot.slane %v69, %v177
    %v179 = vmul.f32 %v86, %v178
    %v180 = vmul.f32 %v87, %v178
    %v181 = vmul.f32 %v88, %v178
    %v182 = vlaneseq
    %v183 = vshrl.u32 %v182, 7
    %v184 = vsub.s32 6, %v183
    %v185 = vrot.slane %v69, %v184
    %187 = vrot.lane.b32.xlu0 %v185, 4
    %v188 = vpop.permute.xlu0 %187
    %v190 = vmul.f32 %v86, %v188
    %v191 = vmul.f32 %v87, %v188
    %v192 = vmul.f32 %v88, %v188
    %196 = vrot.lane.b32.xlu0 %v190, 124
    %v197 = vpop.permute.xlu0 %196
    %198 = vrot.lane.b32.xlu0 %v191, 124
    %v199 = vpop.permute.xlu0 %198
    %200 = vrot.lane.b32.xlu0 %v192, 124
    %v201 = vpop.permute.xlu0 %200
    %v205 = vadd.f32 %v179, %v197
    %v206 = vadd.f32 %v180, %v199
    %v207 = vadd.f32 %v181, %v201
    %v208 = vlaneseq
    %v209 = vshrl.u32 %v208, 7
    %v210 = vsub.s32 7, %v209
    %v211 = vrot.slane %v69, %v210
    %213 = vrot.lane.b32.xlu0 %v211, 8
    %v214 = vpop.permute.xlu0 %213
    %v216 = vmul.f32 %v86, %v214
    %v217 = vmul.f32 %v87, %v214
    %v218 = vmul.f32 %v88, %v214
    %222 = vrot.lane.b32.xlu0 %v216, 120
    %v223 = vpop.permute.xlu0 %222
    %224 = vrot.lane.b32.xlu0 %v217, 120
    %v225 = vpop.permute.xlu0 %224
    %226 = vrot.lane.b32.xlu0 %v218, 120
    %v227 = vpop.permute.xlu0 %226
    %v231 = vadd.f32 %v205, %v223
    %v232 = vadd.f32 %v206, %v225
    %v233 = vadd.f32 %v207, %v227
    %v234 = vlaneseq
    %v235 = vshrl.u32 %v234, 7
    %v236 = vsub.s32 0, %v235
    %v237 = vrot.slane %v70, %v236
    %239 = vrot.lane.b32.xlu0 %v237, 12
    %v240 = vpop.permute.xlu0 %239
    %v242 = vmul.f32 %v86, %v240
    %v243 = vmul.f32 %v87, %v240
    %v244 = vmul.f32 %v88, %v240
    %248 = vrot.lane.b32.xlu0 %v242, 116
    %v249 = vpop.permute.xlu0 %248
    %250 = vrot.lane.b32.xlu0 %v243, 116
    %v251 = vpop.permute.xlu0 %250
    %252 = vrot.lane.b32.xlu0 %v244, 116
    %v253 = vpop.permute.xlu0 %252
    %v257 = vadd.f32 %v231, %v249
    %v258 = vadd.f32 %v232, %v251
    %v259 = vadd.f32 %v233, %v253
    %v260 = vlaneseq
    %v261 = vshrl.u32 %v260, 7
    %v262 = vsub.s32 1, %v261
    %v263 = vrot.slane %v70, %v262
    %265 = vrot.lane.b32.xlu0 %v263, 16
    %v266 = vpop.permute.xlu0 %265
    %v268 = vmul.f32 %v86, %v266
    %v269 = vmul.f32 %v87, %v266
    %v270 = vmul.f32 %v88, %v266
    %274 = vrot.lane.b32.xlu0 %v268, 112
    %v275 = vpop.permute.xlu0 %274
    %276 = vrot.lane.b32.xlu0 %v269, 112
    %v277 = vpop.permute.xlu0 %276
    %278 = vrot.lane.b32.xlu0 %v270, 112
    %v279 = vpop.permute.xlu0 %278
    %v283 = vadd.f32 %v257, %v275
    %v284 = vadd.f32 %v258, %v277
    %v285 = vadd.f32 %v259, %v279
    %v286 = vlaneseq
    %v287 = vshrl.u32 %v286, 7
    %v288 = vsub.s32 2, %v287
    %v289 = vrot.slane %v70, %v288
    %v290 = vmul.f32 %v86, %v289
    %v291 = vmul.f32 %v87, %v289
    %v292 = vmul.f32 %v88, %v289
    %v293 = vlaneseq
    %v294 = vshrl.u32 %v293, 7
    %v295 = vsub.s32 3, %v294
    %v296 = vrot.slane %v70, %v295
    %298 = vrot.lane.b32.xlu0 %v296, 4
    %v299 = vpop.permute.xlu0 %298
    %v301 = vmul.f32 %v86, %v299
    %v302 = vmul.f32 %v87, %v299
    %v303 = vmul.f32 %v88, %v299
    %307 = vrot.lane.b32.xlu0 %v301, 124
    %v308 = vpop.permute.xlu0 %307
    %309 = vrot.lane.b32.xlu0 %v302, 124
    %v310 = vpop.permute.xlu0 %309
    %311 = vrot.lane.b32.xlu0 %v303, 124
    %v312 = vpop.permute.xlu0 %311
    %v316 = vadd.f32 %v290, %v308
    %v317 = vadd.f32 %v291, %v310
    %v318 = vadd.f32 %v292, %v312
    %v319 = vlaneseq
    %v320 = vshrl.u32 %v319, 7
    %v321 = vsub.s32 4, %v320
    %v322 = vrot.slane %v70, %v321
    %324 = vrot.lane.b32.xlu0 %v322, 8
    %v325 = vpop.permute.xlu0 %324
    %v327 = vmul.f32 %v86, %v325
    %v328 = vmul.f32 %v87, %v325
    %v329 = vmul.f32 %v88, %v325
    %333 = vrot.lane.b32.xlu0 %v327, 120
    %v334 = vpop.permute.xlu0 %333
    %335 = vrot.lane.b32.xlu0 %v328, 120
    %v336 = vpop.permute.xlu0 %335
    %337 = vrot.lane.b32.xlu0 %v329, 120
    %v338 = vpop.permute.xlu0 %337
    %v342 = vadd.f32 %v316, %v334
    %v343 = vadd.f32 %v317, %v336
    %v344 = vadd.f32 %v318, %v338
    %v345 = vlaneseq
    %v346 = vshrl.u32 %v345, 7
    %v347 = vsub.s32 5, %v346
    %v348 = vrot.slane %v70, %v347
    %350 = vrot.lane.b32.xlu0 %v348, 12
    %v351 = vpop.permute.xlu0 %350
    %v353 = vmul.f32 %v86, %v351
    %v354 = vmul.f32 %v87, %v351
    %v355 = vmul.f32 %v88, %v351
    %359 = vrot.lane.b32.xlu0 %v353, 116
    %v360 = vpop.permute.xlu0 %359
    %361 = vrot.lane.b32.xlu0 %v354, 116
    %v362 = vpop.permute.xlu0 %361
    %363 = vrot.lane.b32.xlu0 %v355, 116
    %v364 = vpop.permute.xlu0 %363
    %v368 = vadd.f32 %v342, %v360
    %v369 = vadd.f32 %v343, %v362
    %v370 = vadd.f32 %v344, %v364
    %v371 = vlaneseq
    %v372 = vshrl.u32 %v371, 7
    %v373 = vsub.s32 6, %v372
    %v374 = vrot.slane %v70, %v373
    %376 = vrot.lane.b32.xlu0 %v374, 16
    %v377 = vpop.permute.xlu0 %376
    %v379 = vmul.f32 %v86, %v377
    %v380 = vmul.f32 %v87, %v377
    %v381 = vmul.f32 %v88, %v377
    %385 = vrot.lane.b32.xlu0 %v379, 112
    %v386 = vpop.permute.xlu0 %385
    %387 = vrot.lane.b32.xlu0 %v380, 112
    %v388 = vpop.permute.xlu0 %387
    %389 = vrot.lane.b32.xlu0 %v381, 112
    %v390 = vpop.permute.xlu0 %389
    %v394 = vadd.f32 %v368, %v386
    %v395 = vadd.f32 %v369, %v388
    %v396 = vadd.f32 %v370, %v390
    %v397 = vlaneseq
    %v398 = vshrl.u32 %v397, 7
    %v399 = vsub.s32 7, %v398
    %v400 = vrot.slane %v70, %v399
    %v401 = vmul.f32 %v86, %v400
    %v402 = vmul.f32 %v87, %v400
    %v403 = vmul.f32 %v88, %v400
    %v404 = vlaneseq
    %v405 = vshrl.u32 %v404, 7
    %v406 = vsub.s32 0, %v405
    %v407 = vrot.slane %v71, %v406
    %409 = vrot.lane.b32.xlu0 %v407, 4
    %v410 = vpop.permute.xlu0 %409
    %v412 = vmul.f32 %v86, %v410
    %v413 = vmul.f32 %v87, %v410
    %v414 = vmul.f32 %v88, %v410
    %418 = vrot.lane.b32.xlu0 %v412, 124
    %v419 = vpop.permute.xlu0 %418
    %420 = vrot.lane.b32.xlu0 %v413, 124
    %v421 = vpop.permute.xlu0 %420
    %422 = vrot.lane.b32.xlu0 %v414, 124
    %v423 = vpop.permute.xlu0 %422
    %v427 = vadd.f32 %v401, %v419
    %v428 = vadd.f32 %v402, %v421
    %v429 = vadd.f32 %v403, %v423
    %v430 = vlaneseq
    %v431 = vshrl.u32 %v430, 7
    %v432 = vsub.s32 1, %v431
    %v433 = vrot.slane %v71, %v432
    %435 = vrot.lane.b32.xlu0 %v433, 8
    %v436 = vpop.permute.xlu0 %435
    %v438 = vmul.f32 %v86, %v436
    %v439 = vmul.f32 %v87, %v436
    %v440 = vmul.f32 %v88, %v436
    %444 = vrot.lane.b32.xlu0 %v438, 120
    %v445 = vpop.permute.xlu0 %444
    %446 = vrot.lane.b32.xlu0 %v439, 120
    %v447 = vpop.permute.xlu0 %446
    %448 = vrot.lane.b32.xlu0 %v440, 120
    %v449 = vpop.permute.xlu0 %448
    %v453 = vadd.f32 %v427, %v445
    %v454 = vadd.f32 %v428, %v447
    %v455 = vadd.f32 %v429, %v449
    %v456 = vlaneseq
    %v457 = vshrl.u32 %v456, 7
    %v458 = vsub.s32 2, %v457
    %v459 = vrot.slane %v71, %v458
    %461 = vrot.lane.b32.xlu0 %v459, 12
    %v462 = vpop.permute.xlu0 %461
    %v464 = vmul.f32 %v86, %v462
    %v465 = vmul.f32 %v87, %v462
    %v466 = vmul.f32 %v88, %v462
    %470 = vrot.lane.b32.xlu0 %v464, 116
    %v471 = vpop.permute.xlu0 %470
    %472 = vrot.lane.b32.xlu0 %v465, 116
    %v473 = vpop.permute.xlu0 %472
    %474 = vrot.lane.b32.xlu0 %v466, 116
    %v475 = vpop.permute.xlu0 %474
    %v479 = vadd.f32 %v453, %v471
    %v480 = vadd.f32 %v454, %v473
    %v481 = vadd.f32 %v455, %v475
    %v482 = vlaneseq
    %v483 = vshrl.u32 %v482, 7
    %v484 = vsub.s32 3, %v483
    %v485 = vrot.slane %v71, %v484
    %487 = vrot.lane.b32.xlu0 %v485, 16
    %v488 = vpop.permute.xlu0 %487
    %v490 = vmul.f32 %v86, %v488
    %v491 = vmul.f32 %v87, %v488
    %v492 = vmul.f32 %v88, %v488
    %496 = vrot.lane.b32.xlu0 %v490, 112
    %v497 = vpop.permute.xlu0 %496
    %498 = vrot.lane.b32.xlu0 %v491, 112
    %v499 = vpop.permute.xlu0 %498
    %500 = vrot.lane.b32.xlu0 %v492, 112
    %v501 = vpop.permute.xlu0 %500
    %v505 = vadd.f32 %v479, %v497
    %v506 = vadd.f32 %v480, %v499
    %v507 = vadd.f32 %v481, %v501
    %v508 = vlaneseq
    %v509 = vshrl.u32 %v508, 7
    %v510 = vsub.s32 4, %v509
    %v511 = vrot.slane %v71, %v510
    %v512 = vmul.f32 %v86, %v511
    %v513 = vmul.f32 %v87, %v511
    %v514 = vmul.f32 %v88, %v511
    %v515 = vlaneseq
    %v516 = vshrl.u32 %v515, 7
    %v517 = vsub.s32 5, %v516
    %v518 = vrot.slane %v71, %v517
    %520 = vrot.lane.b32.xlu0 %v518, 4
    %v521 = vpop.permute.xlu0 %520
    %v523 = vmul.f32 %v86, %v521
    %v524 = vmul.f32 %v87, %v521
    %v525 = vmul.f32 %v88, %v521
    %529 = vrot.lane.b32.xlu0 %v523, 124
    %v530 = vpop.permute.xlu0 %529
    %531 = vrot.lane.b32.xlu0 %v524, 124
    %v532 = vpop.permute.xlu0 %531
    %533 = vrot.lane.b32.xlu0 %v525, 124
    %v534 = vpop.permute.xlu0 %533
    %v538 = vadd.f32 %v512, %v530
    %v539 = vadd.f32 %v513, %v532
    %v540 = vadd.f32 %v514, %v534
    %v541 = vlaneseq
    %v542 = vshrl.u32 %v541, 7
    %v543 = vsub.s32 6, %v542
    %v544 = vrot.slane %v71, %v543
    %546 = vrot.lane.b32.xlu0 %v544, 8
    %v547 = vpop.permute.xlu0 %546
    %v549 = vmul.f32 %v86, %v547
    %v550 = vmul.f32 %v87, %v547
    %v551 = vmul.f32 %v88, %v547
    %555 = vrot.lane.b32.xlu0 %v549, 120
    %v556 = vpop.permute.xlu0 %555
    %557 = vrot.lane.b32.xlu0 %v550, 120
    %v558 = vpop.permute.xlu0 %557
    %559 = vrot.lane.b32.xlu0 %v551, 120
    %v560 = vpop.permute.xlu0 %559
    %v564 = vadd.f32 %v538, %v556
    %v565 = vadd.f32 %v539, %v558
    %v566 = vadd.f32 %v540, %v560
    %v567 = vlaneseq
    %v568 = vshrl.u32 %v567, 7
    %v569 = vsub.s32 7, %v568
    %v570 = vrot.slane %v71, %v569
    %572 = vrot.lane.b32.xlu0 %v570, 12
    %v573 = vpop.permute.xlu0 %572
    %v575 = vmul.f32 %v86, %v573
    %v576 = vmul.f32 %v87, %v573
    %v577 = vmul.f32 %v88, %v573
    %581 = vrot.lane.b32.xlu0 %v575, 116
    %v582 = vpop.permute.xlu0 %581
    %583 = vrot.lane.b32.xlu0 %v576, 116
    %v584 = vpop.permute.xlu0 %583
    %585 = vrot.lane.b32.xlu0 %v577, 116
    %v586 = vpop.permute.xlu0 %585
    %v590 = vadd.f32 %v564, %v582
    %v591 = vadd.f32 %v565, %v584
    %v592 = vadd.f32 %v566, %v586
    %v593 = vlaneseq
    %v594 = vshrl.u32 %v593, 7
    %v595 = vsub.s32 0, %v594
    %v596 = vrot.slane %v72, %v595
    %598 = vrot.lane.b32.xlu0 %v596, 16
    %v599 = vpop.permute.xlu0 %598
    %v601 = vmul.f32 %v86, %v599
    %v602 = vmul.f32 %v87, %v599
    %v603 = vmul.f32 %v88, %v599
    %607 = vrot.lane.b32.xlu0 %v601, 112
    %v608 = vpop.permute.xlu0 %607
    %609 = vrot.lane.b32.xlu0 %v602, 112
    %v610 = vpop.permute.xlu0 %609
    %611 = vrot.lane.b32.xlu0 %v603, 112
    %v612 = vpop.permute.xlu0 %611
    %v616 = vadd.f32 %v590, %v608
    %v617 = vadd.f32 %v591, %v610
    %v618 = vadd.f32 %v592, %v612
    %vm622 = vcmask 1046528
    %v623 = vrot.slane %v283, 1
    %v624 = vrot.slane %v284, 1
    %v625 = vsel %vm622, %v623, %v624
    %v626 = vrot.slane %v285, 1
    %v627 = vsel %vm622, %v624, %v626
    %v630 = vadd.f32 %v173, %v625
    %v631 = vadd.f32 %v174, %v627
    %v635 = vrot.slane %v505, 1
    %v636 = vrot.slane %v506, 1
    %v637 = vsel %vm622, %v635, %v636
    %v638 = vrot.slane %v507, 1
    %v639 = vsel %vm622, %v636, %v638
    %v643 = vadd.f32 %v394, %v637
    %v644 = vadd.f32 %v395, %v639
    %v645 = vadd.f32 %v396, %v638
    %vm649 = vcmask 1045504
    %v650 = vrot.slane %v643, 2
    %v651 = vrot.slane %v644, 2
    %v652 = vsel %vm649, %v650, %v651
    %v653 = vrot.slane %v645, 2
    %v654 = vsel %vm649, %v651, %v653
    %v657 = vadd.f32 %v630, %v652
    %v658 = vadd.f32 %v631, %v654
    %vm662 = vcmask 1043456
    %v663 = vrot.slane %v616, 4
    %v664 = vrot.slane %v617, 4
    %v665 = vsel %vm662, %v663, %v664
    %v666 = vrot.slane %v618, 4
    %v667 = vsel %vm662, %v664, %v666
    %v670 = vadd.f32 %v657, %v665
    %v671 = vadd.f32 %v658, %v667
    %v672 = vadd.f32 %v670, %v59
    %v673 = vadd.f32 %v671, %v60
    %v674 = vmax.f32 %v61, 0.0
    %v675 = vmax.f32 %v62, 0.0
    %678 = vrot.lane.b32.xlu0 %v674, 8
    %v679 = vpop.permute.xlu0 %678
    %680 = vrot.lane.b32.xlu0 %v675, 8
    %v681 = vpop.permute.xlu0 %680
    %684 = vst.msk [vmem:[#allocation2 + $0x16] sm:$0xff] %vm83, %v679
    %685 = vst.msk [vmem:[#allocation2 + $0x1e] sm:$0xff] %vm83, %v681
    %v686 = vld [vmem:[#allocation2 + $0x14] sm:$0xff]
    %v687 = vld [vmem:[#allocation2 + $0x1c] sm:$0xff]
    %v688 = vld [vmem:[#allocation2 + $0x24] sm:$0xf]
    %v689 = vmul.f32 %v686, %v92
    %v690 = vmul.f32 %v687, %v92
    %v691 = vmul.f32 %v686, %v101
    %v692 = vmul.f32 %v687, %v101
    %695 = vrot.lane.b32.xlu0 %v691, 124
    %v696 = vpop.permute.xlu0 %695
    %697 = vrot.lane.b32.xlu0 %v692, 124
    %v698 = vpop.permute.xlu0 %697
    %v701 = vadd.f32 %v689, %v696
    %v702 = vadd.f32 %v690, %v698
    %v703 = vmul.f32 %v686, %v121
    %v704 = vmul.f32 %v687, %v121
    %707 = vrot.lane.b32.xlu0 %v703, 120
    %v708 = vpop.permute.xlu0 %707
    %709 = vrot.lane.b32.xlu0 %v704, 120
    %v710 = vpop.permute.xlu0 %709
    %v713 = vadd.f32 %v701, %v708
    %v714 = vadd.f32 %v702, %v710
    %v715 = vmul.f32 %v686, %v141
    %v716 = vmul.f32 %v687, %v141
    %719 = vrot.lane.b32.xlu0 %v715, 116
    %v720 = vpop.permute.xlu0 %719
    %721 = vrot.lane.b32.xlu0 %v716, 116
    %v722 = vpop.permute.xlu0 %721
    %v725 = vadd.f32 %v713, %v720
    %v726 = vadd.f32 %v714, %v722
    %v727 = vmul.f32 %v686, %v161
    %v728 = vmul.f32 %v687, %v161
    %731 = vrot.lane.b32.xlu0 %v727, 112
    %v732 = vpop.permute.xlu0 %731
    %733 = vrot.lane.b32.xlu0 %v728, 112
    %v734 = vpop.permute.xlu0 %733
    %v737 = vadd.f32 %v725, %v732
    %v738 = vadd.f32 %v726, %v734
    %v739 = vmul.f32 %v686, %v178
    %v740 = vmul.f32 %v687, %v178
    %v741 = vmul.f32 %v688, %v178
    %v742 = vmul.f32 %v686, %v188
    %v743 = vmul.f32 %v687, %v188
    %v744 = vmul.f32 %v688, %v188
    %748 = vrot.lane.b32.xlu0 %v742, 124
    %v749 = vpop.permute.xlu0 %748
    %750 = vrot.lane.b32.xlu0 %v743, 124
    %v751 = vpop.permute.xlu0 %750
    %752 = vrot.lane.b32.xlu0 %v744, 124
    %v753 = vpop.permute.xlu0 %752
    %v757 = vadd.f32 %v739, %v749
    %v758 = vadd.f32 %v740, %v751
    %v759 = vadd.f32 %v741, %v753
    %v760 = vmul.f32 %v686, %v214
    %v761 = vmul.f32 %v687, %v214
    %v762 = vmul.f32 %v688, %v214
    %766 = vrot.lane.b32.xlu0 %v760, 120
    %v767 = vpop.permute.xlu0 %766
    %768 = vrot.lane.b32.xlu0 %v761, 120
    %v769 = vpop.permute.xlu0 %768
    %770 = vrot.lane.b32.xlu0 %v762, 120
    %v771 = vpop.permute.xlu0 %770
    %v775 = vadd.f32 %v757, %v767
    %v776 = vadd.f32 %v758, %v769
    %v777 = vadd.f32 %v759, %v771
    %v778 = vmul.f32 %v686, %v240
    %v779 = vmul.f32 %v687, %v240
    %v780 = vmul.f32 %v688, %v240
    %784 = vrot.lane.b32.xlu0 %v778, 116
    %v785 = vpop.permute.xlu0 %784
    %786 = vrot.lane.b32.xlu0 %v779, 116
    %v787 = vpop.permute.xlu0 %786
    %788 = vrot.lane.b32.xlu0 %v780, 116
    %v789 = vpop.permute.xlu0 %788
    %v793 = vadd.f32 %v775, %v785
    %v794 = vadd.f32 %v776, %v787
    %v795 = vadd.f32 %v777, %v789
    %v796 = vmul.f32 %v686, %v266
    %v797 = vmul.f32 %v687, %v266
    %v798 = vmul.f32 %v688, %v266
    %802 = vrot.lane.b32.xlu0 %v796, 112
    %v803 = vpop.permute.xlu0 %802
    %804 = vrot.lane.b32.xlu0 %v797, 112
    %v805 = vpop.permute.xlu0 %804
    %806 = vrot.lane.b32.xlu0 %v798, 112
    %v807 = vpop.permute.xlu0 %806
    %v811 = vadd.f32 %v793, %v803
    %v812 = vadd.f32 %v794, %v805
    %v813 = vadd.f32 %v795, %v807
    %v814 = vmul.f32 %v686, %v289
    %v815 = vmul.f32 %v687, %v289
    %v816 = vmul.f32 %v688, %v289
    %v817 = vmul.f32 %v686, %v299
    %v818 = vmul.f32 %v687, %v299
    %v819 = vmul.f32 %v688, %v299
    %823 = vrot.lane.b32.xlu0 %v817, 124
    %v824 = vpop.permute.xlu0 %823
    %825 = vrot.lane.b32.xlu0 %v818, 124
    %v826 = vpop.permute.xlu0 %825
    %827 = vrot.lane.b32.xlu0 %v819, 124
    %v828 = vpop.permute.xlu0 %827
    %v832 = vadd.f32 %v814, %v824
    %v833 = vadd.f32 %v815, %v826
    %v834 = vadd.f32 %v816, %v828
    %v835 = vmul.f32 %v686, %v325
    %v836 = vmul.f32 %v687, %v325
    %v837 = vmul.f32 %v688, %v325
    %841 = vrot.lane.b32.xlu0 %v835, 120
    %v842 = vpop.permute.xlu0 %841
    %843 = vrot.lane.b32.xlu0 %v836, 120
    %v844 = vpop.permute.xlu0 %843
    %845 = vrot.lane.b32.xlu0 %v837, 120
    %v846 = vpop.permute.xlu0 %845
    %v850 = vadd.f32 %v832, %v842
    %v851 = vadd.f32 %v833, %v844
    %v852 = vadd.f32 %v834, %v846
    %v853 = vmul.f32 %v686, %v351
    %v854 = vmul.f32 %v687, %v351
    %v855 = vmul.f32 %v688, %v351
    %859 = vrot.lane.b32.xlu0 %v853, 116
    %v860 = vpop.permute.xlu0 %859
    %861 = vrot.lane.b32.xlu0 %v854, 116
    %v862 = vpop.permute.xlu0 %861
    %863 = vrot.lane.b32.xlu0 %v855, 116
    %v864 = vpop.permute.xlu0 %863
    %v868 = vadd.f32 %v850, %v860
    %v869 = vadd.f32 %v851, %v862
    %v870 = vadd.f32 %v852, %v864
    %v871 = vmul.f32 %v686, %v377
    %v872 = vmul.f32 %v687, %v377
    %v873 = vmul.f32 %v688, %v377
    %877 = vrot.lane.b32.xlu0 %v871, 112
    %v878 = vpop.permute.xlu0 %877
    %879 = vrot.lane.b32.xlu0 %v872, 112
    %v880 = vpop.permute.xlu0 %879
    %881 = vrot.lane.b32.xlu0 %v873, 112
    %v882 = vpop.permute.xlu0 %881
    %v886 = vadd.f32 %v868, %v878
    %v887 = vadd.f32 %v869, %v880
    %v888 = vadd.f32 %v870, %v882
    %v889 = vmul.f32 %v686, %v400
    %v890 = vmul.f32 %v687, %v400
    %v891 = vmul.f32 %v688, %v400
    %v892 = vmul.f32 %v686, %v410
    %v893 = vmul.f32 %v687, %v410
    %v894 = vmul.f32 %v688, %v410
    %898 = vrot.lane.b32.xlu0 %v892, 124
    %v899 = vpop.permute.xlu0 %898
    %900 = vrot.lane.b32.xlu0 %v893, 124
    %v901 = vpop.permute.xlu0 %900
    %902 = vrot.lane.b32.xlu0 %v894, 124
    %v903 = vpop.permute.xlu0 %902
    %v907 = vadd.f32 %v889, %v899
    %v908 = vadd.f32 %v890, %v901
    %v909 = vadd.f32 %v891, %v903
    %v910 = vmul.f32 %v686, %v436
    %v911 = vmul.f32 %v687, %v436
    %v912 = vmul.f32 %v688, %v436
    %916 = vrot.lane.b32.xlu0 %v910, 120
    %v917 = vpop.permute.xlu0 %916
    %918 = vrot.lane.b32.xlu0 %v911, 120
    %v919 = vpop.permute.xlu0 %918
    %920 = vrot.lane.b32.xlu0 %v912, 120
    %v921 = vpop.permute.xlu0 %920
    %v925 = vadd.f32 %v907, %v917
    %v926 = vadd.f32 %v908, %v919
    %v927 = vadd.f32 %v909, %v921
    %v928 = vmul.f32 %v686, %v462
    %v929 = vmul.f32 %v687, %v462
    %v930 = vmul.f32 %v688, %v462
    %934 = vrot.lane.b32.xlu0 %v928, 116
    %v935 = vpop.permute.xlu0 %934
    %936 = vrot.lane.b32.xlu0 %v929, 116
    %v937 = vpop.permute.xlu0 %936
    %938 = vrot.lane.b32.xlu0 %v930, 116
    %v939 = vpop.permute.xlu0 %938
    %v943 = vadd.f32 %v925, %v935
    %v944 = vadd.f32 %v926, %v937
    %v945 = vadd.f32 %v927, %v939
    %v946 = vmul.f32 %v686, %v488
    %v947 = vmul.f32 %v687, %v488
    %v948 = vmul.f32 %v688, %v488
    %952 = vrot.lane.b32.xlu0 %v946, 112
    %v953 = vpop.permute.xlu0 %952
    %954 = vrot.lane.b32.xlu0 %v947, 112
    %v955 = vpop.permute.xlu0 %954
    %956 = vrot.lane.b32.xlu0 %v948, 112
    %v957 = vpop.permute.xlu0 %956
    %v961 = vadd.f32 %v943, %v953
    %v962 = vadd.f32 %v944, %v955
    %v963 = vadd.f32 %v945, %v957
    %v964 = vmul.f32 %v686, %v511
    %v965 = vmul.f32 %v687, %v511
    %v966 = vmul.f32 %v688, %v511
    %v967 = vmul.f32 %v686, %v521
    %v968 = vmul.f32 %v687, %v521
    %v969 = vmul.f32 %v688, %v521
    %973 = vrot.lane.b32.xlu0 %v967, 124
    %v974 = vpop.permute.xlu0 %973
    %975 = vrot.lane.b32.xlu0 %v968, 124
    %v976 = vpop.permute.xlu0 %975
    %977 = vrot.lane.b32.xlu0 %v969, 124
    %v978 = vpop.permute.xlu0 %977
    %v982 = vadd.f32 %v964, %v974
    %v983 = vadd.f32 %v965, %v976
    %v984 = vadd.f32 %v966, %v978
    %v985 = vmul.f32 %v686, %v547
    %v986 = vmul.f32 %v687, %v547
    %v987 = vmul.f32 %v688, %v547
    %991 = vrot.lane.b32.xlu0 %v985, 120
    %v992 = vpop.permute.xlu0 %991
    %993 = vrot.lane.b32.xlu0 %v986, 120
    %v994 = vpop.permute.xlu0 %993
    %995 = vrot.lane.b32.xlu0 %v987, 120
    %v996 = vpop.permute.xlu0 %995
    %v1000 = vadd.f32 %v982, %v992
    %v1001 = vadd.f32 %v983, %v994
    %v1002 = vadd.f32 %v984, %v996
    %v1003 = vmul.f32 %v686, %v573
    %v1004 = vmul.f32 %v687, %v573
    %v1005 = vmul.f32 %v688, %v573
    %1009 = vrot.lane.b32.xlu0 %v1003, 116
    %v1010 = vpop.permute.xlu0 %1009
    %1011 = vrot.lane.b32.xlu0 %v1004, 116
    %v1012 = vpop.permute.xlu0 %1011
    %1013 = vrot.lane.b32.xlu0 %v1005, 116
    %v1014 = vpop.permute.xlu0 %1013
    %v1018 = vadd.f32 %v1000, %v1010
    %v1019 = vadd.f32 %v1001, %v1012
    %v1020 = vadd.f32 %v1002, %v1014
    %v1021 = vmul.f32 %v686, %v599
    %v1022 = vmul.f32 %v687, %v599
    %v1023 = vmul.f32 %v688, %v599
    %1027 = vrot.lane.b32.xlu0 %v1021, 112
    %v1028 = vpop.permute.xlu0 %1027
    %1029 = vrot.lane.b32.xlu0 %v1022, 112
    %v1030 = vpop.permute.xlu0 %1029
    %1031 = vrot.lane.b32.xlu0 %v1023, 112
    %v1032 = vpop.permute.xlu0 %1031
    %v1036 = vadd.f32 %v1018, %v1028
    %v1037 = vadd.f32 %v1019, %v1030
    %v1038 = vadd.f32 %v1020, %v1032
    %v1042 = vrot.slane %v811, 1
    %v1043 = vrot.slane %v812, 1
    %v1044 = vsel %vm622, %v1042, %v1043
    %v1045 = vrot.slane %v813, 1
    %v1046 = vsel %vm622, %v1043, %v1045
    %v1049 = vadd.f32 %v737, %v1044
    %v1050 = vadd.f32 %v738, %v1046
    %v1054 = vrot.slane %v961, 1
    %v1055 = vrot.slane %v962, 1
    %v1056 = vsel %vm622, %v1054, %v1055
    %v1057 = vrot.slane %v963, 1
    %v1058 = vsel %vm622, %v1055, %v1057
    %v1062 = vadd.f32 %v886, %v1056
    %v1063 = vadd.f32 %v887, %v1058
    %v1064 = vadd.f32 %v888, %v1057
    %v1068 = vrot.slane %v1062, 2
    %v1069 = vrot.slane %v1063, 2
    %v1070 = vsel %vm649, %v1068, %v1069
    %v1071 = vrot.slane %v1064, 2
    %v1072 = vsel %vm649, %v1069, %v1071
    %v1075 = vadd.f32 %v1049, %v1070
    %v1076 = vadd.f32 %v1050, %v1072
    %v1080 = vrot.slane %v1036, 4
    %v1081 = vrot.slane %v1037, 4
    %v1082 = vsel %vm662, %v1080, %v1081
    %v1083 = vrot.slane %v1038, 4
    %v1084 = vsel %vm662, %v1081, %v1083
    %v1087 = vadd.f32 %v1075, %v1082
    %v1088 = vadd.f32 %v1076, %v1084
    %v1089 = vadd.f32 %v1087, %v61
    %v1090 = vadd.f32 %v1088, %v62
    %v1091 = vld [vmem:[#allocation8] sm:$0xff]
    %v1092 = vld [vmem:[#allocation8 + $0x8] sm:$0xff]
    %v1093 = vld [vmem:[#allocation8 + $0x10] sm:$0xff]
    %v1094 = vld [vmem:[#allocation8 + $0x18] sm:$0xff]
    %v1095 = vld [vmem:[#allocation8 + $0x20] sm:$0xff]
    %v1096 = vld [vmem:[#allocation8 + $0x28] sm:$0xff]
    %v1097 = vld [vmem:[#allocation8 + $0x30] sm:$0xff]
    %v1098 = vld [vmem:[#allocation8 + $0x38] sm:$0xff]
    %v1099 = vld [vmem:[%s3] sm:$0x1]
    %v1101 = vlaneseq
    %v1102 = vshrl.u32 %v1101, 7
    %v1103 = vsub.s32 0, %v1102
    %v1104 = vrot.slane %v1099, %v1103
    %vm1106 = vcmask 523264
    %v1108 = vsel %vm1106, %v672, 0
    %v1111 = vsel %vm1106, %v673, 0
    %v1114 = vsel %vm1106, %v1089, 0
    %v1117 = vsel %vm1106, %v1090, 0
    %1119 = vmatprep.subr.mxu0 0.0
    %1120 = vmatpush1.msra.mxu0 %v1091
    %1121 = vmatprep.subr.mxu0 0.0
    %1122 = vmatpush1.msra.mxu0 %v1092
    %1123 = vmatprep.subr.mxu0 0.0
    %1124 = vmatpush1.msra.mxu0 %v1093
    %1125 = vmatprep.subr.mxu0 0.0
    %1126 = vmatpush1.msra.mxu0 %v1094
    %1127 = vmatprep.subr.mxu0 0.0
    %1128 = vmatpush1.msra.mxu0 %v1095
    %1129 = vmatprep.subr.mxu0 0.0
    %1130 = vmatpush1.msra.mxu0 %v1096
    %1131 = vmatprep.subr.mxu0 0.0
    %1132 = vmatpush1.msra.mxu0 %v1097
    %1133 = vmatprep.subr.mxu0 0.0
    %1134 = vmatpush1.msra.mxu0 %v1098
    %1135 = vmatprep.subr.mxu0 0.0
    %1136 = vmatpush1.msra.mxu0 0.0
    %1137 = vmatprep.subr.mxu0 0.0
    %1138 = vmatpush1.msra.mxu0 0.0
    %1139 = vmatprep.subr.mxu0 0.0
    %1140 = vmatpush1.msra.mxu0 0.0
    %1141 = vmatprep.subr.mxu0 0.0
    %1142 = vmatpush1.msra.mxu0 0.0
    %1143 = vmatprep.subr.mxu0 0.0
    %1144 = vmatpush1.msra.mxu0 0.0
    %1145 = vmatprep.subr.mxu0 0.0
    %1146 = vmatpush1.msra.mxu0 0.0
    %1147 = vmatprep.subr.mxu0 0.0
    %1148 = vmatpush1.msra.mxu0 0.0
    %1149 = vmatprep.subr.mxu0 0.0
    %1150 = vmatpush1.msra.mxu0 0.0
    %1151 = vmatprep.subr.mxu0 0.0
    %1152 = vmatpush1.msra.mxu0 0.0
    %1153 = vmatprep.subr.mxu0 0.0
    %1154 = vmatpush1.msra.mxu0 0.0
    %1155 = vmatprep.subr.mxu0 0.0
    %1156 = vmatpush1.msra.mxu0 0.0
    %1157 = vmatprep.subr.mxu0 0.0
    %1158 = vmatpush1.msra.mxu0 0.0
    %1159 = vmatprep.subr.mxu0 0.0
    %1160 = vmatpush1.msra.mxu0 0.0
    %1161 = vmatprep.subr.mxu0 0.0
    %1162 = vmatpush1.msra.mxu0 0.0
    %1163 = vmatprep.subr.mxu0 0.0
    %1164 = vmatpush1.msra.mxu0 0.0
    %1165 = vmatprep.subr.mxu0 0.0
    %1166 = vmatpush1.msra.mxu0 0.0
    %1167 = vmatprep.subr.mxu0 0.0
    %1168 = vmatpush1.msra.mxu0 0.0
    %1169 = vmatprep.subr.mxu0 0.0
    %1170 = vmatpush1.msra.mxu0 0.0
    %1171 = vmatprep.subr.mxu0 0.0
    %1172 = vmatpush1.msra.mxu0 0.0
    %1173 = vmatprep.subr.mxu0 0.0
    %1174 = vmatpush1.msra.mxu0 0.0
    %1175 = vmatprep.subr.mxu0 0.0
    %1176 = vmatpush1.msra.mxu0 0.0
    %1177 = vmatprep.subr.mxu0 0.0
    %1178 = vmatpush1.msra.mxu0 0.0
    %1179 = vmatprep.subr.mxu0 0.0
    %1180 = vmatpush1.msra.mxu0 0.0
    %1181 = vmatprep.subr.mxu0 0.0
    %1182 = vmatpush1.msra.mxu0 0.0
    %1183 = vmatprep.mubr.f32.mxu0 0.0
    %1184 = vmatmul.mubr.f32.gmra.mrb[0].mxu0 %v1108
    %v1185 = vpop.f32.mrb[0].mxu0
    %v1186 = vadd.f32 %v1104, %v1185
    %v1187 = vpop.f32.mrb[0].mxu0
    %1188 = vmatprep.mubr.f32.mxu0 0.0
    %1189 = vmatmul.mubr.f32.gmra.mrb[0].mxu0 %v1111
    %v1190 = vpop.f32.mrb[0].mxu0
    %v1191 = vadd.f32 %v1104, %v1190
    %v1192 = vpop.f32.mrb[0].mxu0
    %1193 = vmatprep.mubr.f32.mxu0 0.0
    %1194 = vmatmul.mubr.f32.gmra.mrb[0].mxu0 %v1114
    %v1195 = vpop.f32.mrb[0].mxu0
    %v1196 = vadd.f32 %v1104, %v1195
    %v1197 = vpop.f32.mrb[0].mxu0
    %1198 = vmatprep.mubr.f32.mxu0 0.0
    %1199 = vmatmul.mubr.f32.gmra.mrb[0].mxu0 %v1117
    %v1200 = vpop.f32.mrb[0].mxu0
    %v1201 = vadd.f32 %v1104, %v1200
    %v1202 = vpop.f32.mrb[0].mxu0
    %1203 = vdwg.mxu0
    %1204 = vst [vmem:[#allocation9] sm:$0xff] %v1186
    %1205 = vst [vmem:[#allocation9 + $0x8] sm:$0xff] %v1191
    %s1206 = scalar_lea.vmem [#allocation9], 16
    %1207 = vst [vmem:[%s1206] sm:$0xff] %v1196
    %1208 = vst [vmem:[%s1206 + $0x8] sm:$0xff] %v1201
    // Predicated region
    $region30: #{tpu_custom_call.1} parent=1 // pred_check
      _
    $region31: #{tpu_custom_call.1} parent=1 // pred_check_branch
      %1210 = sbr.rel (0) target = $region33
    $region32: #{tpu_custom_call.1} parent=1 // pred_region
      %s1212 = ssub.s32 512, 512
      %1213 = vsyncadd [#allocation5], %s1212
      %s1214 = sshll.u32 [#allocation9], 4
      %s1215 = int_to_ptr.vmem [resolvable:$true] %s1214
      %1220 = dma.vmem_to_hbm [thread:$0]  %s1215, 512, %s4, [#allocation5], 128, 128, 8
    $region33: #{tpu_custom_call.1} parent=1 // pred_fallthru
      _
    // Predicated region
    $region34: #{tpu_custom_call.1} parent=1 // pred_check
      _
    $region35: #{tpu_custom_call.1} parent=1 // pred_check_branch
      %1222 = sbr.rel (0) target = $region37
    $region36: #{tpu_custom_call.1} parent=1 // pred_region
      %1223 = dma.done [#allocation5], 512
    $region37: #{tpu_custom_call.1} parent=1 // pred_fallthru
      _
    %1224 = vsyncpa [#allocation4], 1
    %1225 = vsyncpa [#allocation7], 1
    %1226 = vsyncpa [#allocation5], 1

</llo_original>
